<compile_context>
chip_gen: v5e
topology: v5e:2x2
jax: 0.10.0
libtpu: 0.0.40
codegen_flags: <defaults>
</compile_context>

<pallas_src>
import jax
import jax.numpy as jnp
from jax.experimental import pallas as pl
from jax.experimental.pallas import tpu as pltpu


@jax.jit
def residual_block_nobn(x_nchw, w1, b1, w2, b2):
    """x_nchw: (N, C, H, W) f32; w*: (Cout, Cin, 3, 3) PyTorch layout; b*: (C,)."""
    N, C, H, W = x_nchw.shape
    HW = H * W
    PAD = 128                       # lane-aligned zero halo on each side of the flat pixel axis
    F = PAD + HW + PAD
    s0 = PAD
    assert PAD >= W + 1, "halo must cover one full row shift"

    # Only free reshapes at the boundary (arrays stay NCHW-contiguous in HBM).
    x_flat = x_nchw.reshape(N, C, HW)
    # Regroup weights per kw so each kw becomes one (C, 3C) @ (3C, HW) matmul:
    #   wk[kw, co, kh*C + ci] = w[co, ci, kh, kw]
    wk1 = jnp.transpose(w1, (3, 0, 2, 1)).reshape(3, C, 3 * C).astype(jnp.bfloat16)
    wk2 = jnp.transpose(w2, (3, 0, 2, 1)).reshape(3, C, 3 * C).astype(jnp.bfloat16)
    bk1 = b1.reshape(C, 1).astype(jnp.float32)
    bk2 = b2.reshape(C, 1).astype(jnp.float32)

    w_is_pow2 = (W & (W - 1)) == 0

    def kernel(x_ref, w1_ref, b1_ref, w2_ref, b2_ref, o_ref, src):
        # Column-within-row index of every flattened pixel (lane axis), for W-boundary masks.
        lane = jax.lax.broadcasted_iota(jnp.int32, (1, HW), 1)
        col = (lane & (W - 1)) if w_is_pow2 else (lane % W)
        keep = [col != 0, None, col != (W - 1)]          # valid lanes per kw tap

        # Zero the halo strips ONCE per step; they are never written afterwards and the
        # interior is fully overwritten before each conv, so each step is self-contained.
        src[:, :s0] = jnp.zeros((C, s0), jnp.bfloat16)
        src[:, s0 + HW:] = jnp.zeros((C, F - s0 - HW), jnp.bfloat16)

        def stage(interior_bf16):
            src[:, s0:s0 + HW] = interior_bf16           # lane-aligned interior store

        def conv3x3(w_ref, b_ref):
            acc = jnp.zeros((C, HW), jnp.float32)
            for kw in range(3):
                # Fuse the three kh taps along K for this kw:
                #   slab[kh*C + ci, i*W + j] = padded_src[ci, i + kh - 1, j + kw - 1]
                slab = jnp.concatenate(
                    [src[:, s0 + (kh - 1) * W + (kw - 1):
                            s0 + (kh - 1) * W + (kw - 1) + HW] for kh in range(3)],
                    axis=0)                                           # (3C, HW) bf16
                if keep[kw] is not None:      # mask W-boundary wrap-around lanes
                    slab = jnp.where(keep[kw], slab, jnp.zeros((), jnp.bfloat16))
                acc = acc + jnp.dot(w_ref[kw], slab,
                                    preferred_element_type=jnp.float32)
            return acc + b_ref[...]

        x_f32 = x_ref[0]                                        # (C, HW), lane-dense
        stage(x_f32.astype(jnp.bfloat16))
        h1 = jnp.maximum(conv3x3(w1_ref, b1_ref), 0.0)          # conv1 + bias + ReLU
        stage(h1.astype(jnp.bfloat16))                          # reuse the same buffer
        h2 = conv3x3(w2_ref, b2_ref)                            # conv2 + bias
        o_ref[0] = (x_f32 + h2).astype(o_ref.dtype)             # exact f32 residual add

    out = pl.pallas_call(
        kernel,
        out_shape=jax.ShapeDtypeStruct((N, C, HW), x_nchw.dtype),
        grid_spec=pltpu.PrefetchScalarGridSpec(
            num_scalar_prefetch=0,
            grid=(N,),                                          # one image per grid step
            in_specs=[
                pl.BlockSpec((1, C, HW), lambda b: (b, 0, 0)),
                pl.BlockSpec((3, C, 3 * C), lambda b: (0, 0, 0)),
                pl.BlockSpec((C, 1), lambda b: (0, 0)),
                pl.BlockSpec((3, C, 3 * C), lambda b: (0, 0, 0)),
                pl.BlockSpec((C, 1), lambda b: (0, 0)),
            ],
            out_specs=pl.BlockSpec((1, C, HW), lambda b: (b, 0, 0)),
            scratch_shapes=[pltpu.VMEM((C, F), jnp.bfloat16)],  # shared zero-haloed conv source
        ),
        compiler_params=pltpu.CompilerParams(
            dimension_semantics=("parallel",)),     # batch shards across TCs on v7x
    )(x_flat, wk1, bk1, wk2, bk2)
    return out.reshape(N, C, H, W)


def _ref_forward(x, w1, b1, w2, b2):
    """Pure-JAX NCHW reference mirroring the kernel's bf16-operand / f32-accumulate convs."""
    def conv(x, w, b):
        y = jax.lax.conv_general_dilated(
            x.astype(jnp.bfloat16), w.astype(jnp.bfloat16),
            window_strides=(1, 1), padding=((1, 1), (1, 1)),
            dimension_numbers=('NCHW', 'OIHW', 'NCHW'),
            preferred_element_type=jnp.float32)
        return y + b.reshape(1, -1, 1, 1)
    mid = jax.nn.relu(conv(x, w1, b1))
    out = conv(mid, w2, b2)
    return x + out


if __name__ == "__main__":
    key = jax.random.PRNGKey(0)
    N, C, H, W = 2, 64, 16, 16                 # nf = 64 (module default)
    k_x, k_w1, k_w2 = jax.random.split(key, 3)

    # Deterministic init mirroring initialize_weights(..., scale=0.1):
    # kaiming_normal_(a=0, mode='fan_in') -> std = sqrt(2 / fan_in), fan_in = Cin*3*3
    fan_in = C * 3 * 3
    std = (2.0 / fan_in) ** 0.5
    w1 = (jax.random.normal(k_w1, (C, C, 3, 3), jnp.float32) * std) * 0.1
    w2 = (jax.random.normal(k_w2, (C, C, 3, 3), jnp.float32) * std) * 0.1
    b1 = jnp.zeros((C,), jnp.float32)
    b2 = jnp.zeros((C,), jnp.float32)

    x = jax.random.normal(k_x, (N, C, H, W), jnp.float32)

    out = jax.block_until_ready(residual_block_nobn(x, w1, b1, w2, b2))

    ref = _ref_forward(x, w1, b1, w2, b2)
    assert out.shape == (N, C, H, W)
    max_err = float(jnp.max(jnp.abs(out - ref)))
    assert jnp.allclose(out, ref, atol=5e-3, rtol=5e-3), \
        f"mismatch vs reference (max|err| = {max_err})"
    print("KERNEL_OK")
</pallas_src>

<mosaic_0001>
module attributes {stable_mosaic.version = 11 : i64} {
  func.func @kernel(%arg0: i32, %arg1: memref<1x64x256xf32, #tpu.memory_space<vmem>>, %arg2: memref<3x64x192xbf16, #tpu.memory_space<vmem>>, %arg3: memref<64x1xf32, #tpu.memory_space<vmem>>, %arg4: memref<3x64x192xbf16, #tpu.memory_space<vmem>>, %arg5: memref<64x1xf32, #tpu.memory_space<vmem>>, %arg6: memref<1x64x256xf32, #tpu.memory_space<vmem>>, %arg7: memref<64x512xbf16, #tpu.memory_space<vmem>>) attributes {dimension_semantics = [#tpu.dimension_semantics<parallel>], iteration_bounds = array<i64: 2>, scalar_prefetch = 0 : i64, scratch_operands = 1 : i64, tpu.core_type = #tpu.core_type<tc>, window_params = [{transform_indices = @transform_0, window_bounds = array<i64: 1, 64, 256>}, {pipeline_mode = #tpu.pipeline_mode<synchronous>, transform_indices = @transform_1, window_bounds = array<i64: 3, 64, 192>}, {pipeline_mode = #tpu.pipeline_mode<synchronous>, transform_indices = @transform_2, window_bounds = array<i64: 64, 1>}, {pipeline_mode = #tpu.pipeline_mode<synchronous>, transform_indices = @transform_3, window_bounds = array<i64: 3, 64, 192>}, {pipeline_mode = #tpu.pipeline_mode<synchronous>, transform_indices = @transform_4, window_bounds = array<i64: 64, 1>}, {transform_indices = @transform_5, window_bounds = array<i64: 1, 64, 256>}]} {
    %0 = tpu.iota {dimensions = array<i32: 1>} : vector<1x256xi32>
    %c15_i32 = arith.constant 15 : i32
    %1 = vector.broadcast %c15_i32 : i32 to vector<1x256xi32>
    %2 = arith.andi %0, %1 : vector<1x256xi32>
    %c0_i32 = arith.constant 0 : i32
    %3 = vector.broadcast %c0_i32 : i32 to vector<1x256xi32>
    %4 = arith.cmpi ne, %2, %3 : vector<1x256xi32>
    %c15_i32_0 = arith.constant 15 : i32
    %5 = vector.broadcast %c15_i32_0 : i32 to vector<1x256xi32>
    %6 = arith.cmpi ne, %2, %5 : vector<1x256xi32>
    %cst = arith.constant 0.000000e+00 : bf16
    %7 = vector.broadcast %cst : bf16 to vector<64x128xbf16>
    %c0 = arith.constant 0 : index
    %c0_1 = arith.constant 0 : index
    %8 = vector.load %arg7[%c0, %c0_1] : memref<64x512xbf16, #tpu.memory_space<vmem>>, vector<64x128xbf16>
    tpu.vector_store %arg7[%c0, %c0_1], %7 {strides = array<i32>} : memref<64x512xbf16, #tpu.memory_space<vmem>>, vector<64x128xbf16>,
    %cst_2 = arith.constant 0.000000e+00 : bf16
    %9 = vector.broadcast %cst_2 : bf16 to vector<64x128xbf16>
    %c0_3 = arith.constant 0 : index
    %c384 = arith.constant 384 : index
    %10 = vector.load %arg7[%c0_3, %c384] : memref<64x512xbf16, #tpu.memory_space<vmem>>, vector<64x128xbf16>
    tpu.vector_store %arg7[%c0_3, %c384], %9 {strides = array<i32>} : memref<64x512xbf16, #tpu.memory_space<vmem>>, vector<64x128xbf16>,
    %c0_4 = arith.constant 0 : index
    %c0_5 = arith.constant 0 : index
    %c0_6 = arith.constant 0 : index
    %11 = vector.load %arg1[%c0_4, %c0_5, %c0_6] : memref<1x64x256xf32, #tpu.memory_space<vmem>>, vector<1x64x256xf32>
    %12 = vector.shape_cast %11 : vector<1x64x256xf32> to vector<64x256xf32>
    %13 = arith.truncf %12 : vector<64x256xf32> to vector<64x256xbf16>
    %c0_7 = arith.constant 0 : index
    %c128 = arith.constant 128 : index
    %14 = vector.load %arg7[%c0_7, %c128] : memref<64x512xbf16, #tpu.memory_space<vmem>>, vector<64x256xbf16>
    tpu.vector_store %arg7[%c0_7, %c128], %13 {strides = array<i32>} : memref<64x512xbf16, #tpu.memory_space<vmem>>, vector<64x256xbf16>,
    %cst_8 = arith.constant 0.000000e+00 : f32
    %15 = vector.broadcast %cst_8 : f32 to vector<64x256xf32>
    %c0_9 = arith.constant 0 : index
    %c111 = arith.constant 111 : index
    %16 = vector.load %arg7[%c0_9, %c111] : memref<64x512xbf16, #tpu.memory_space<vmem>>, vector<64x256xbf16>
    %c0_10 = arith.constant 0 : index
    %c127 = arith.constant 127 : index
    %17 = vector.load %arg7[%c0_10, %c127] : memref<64x512xbf16, #tpu.memory_space<vmem>>, vector<64x256xbf16>
    %c0_11 = arith.constant 0 : index
    %c143 = arith.constant 143 : index
    %18 = vector.load %arg7[%c0_11, %c143] : memref<64x512xbf16, #tpu.memory_space<vmem>>, vector<64x256xbf16>
    %19 = tpu.concatenate %16, %17, %18 in 0 : vector<64x256xbf16>, vector<64x256xbf16>, vector<64x256xbf16> -> vector<192x256xbf16>
    %cst_12 = arith.constant 0.000000e+00 : bf16
    %20 = vector.shape_cast %4 : vector<1x256xi1> to vector<1x256xi1>
    %21 = vector.broadcast %20 : vector<1x256xi1> to vector<192x256xi1>
    %22 = vector.broadcast %cst_12 : bf16 to vector<192x256xbf16>
    %23 = arith.select %21, %19, %22 : vector<192x256xi1>, vector<192x256xbf16>
    %c0_13 = arith.constant 0 : index
    %c0_14 = arith.constant 0 : index
    %c0_15 = arith.constant 0 : index
    %24 = vector.load %arg2[%c0_13, %c0_14, %c0_15] : memref<3x64x192xbf16, #tpu.memory_space<vmem>>, vector<1x64x192xbf16>
    %25 = vector.shape_cast %24 : vector<1x64x192xbf16> to vector<64x192xbf16>
    %cst_16 = arith.constant dense<0.000000e+00> : vector<64x256xf32>
    %26 = tpu.matmul %25, %23, %cst_16 {dimension_numbers = #tpu.dot_dimension_numbers<[1], [0], [0], [1], [0, 0, 1, 1], [], []>} : vector<64x192xbf16>, vector<192x256xbf16>, vector<64x256xf32> -> vector<64x256xf32>
    %27 = arith.addf %15, %26 : vector<64x256xf32>
    %c0_17 = arith.constant 0 : index
    %c112 = arith.constant 112 : index
    %28 = vector.load %arg7[%c0_17, %c112] : memref<64x512xbf16, #tpu.memory_space<vmem>>, vector<64x256xbf16>
    %c0_18 = arith.constant 0 : index
    %c128_19 = arith.constant 128 : index
    %29 = vector.load %arg7[%c0_18, %c128_19] : memref<64x512xbf16, #tpu.memory_space<vmem>>, vector<64x256xbf16>
    %c0_20 = arith.constant 0 : index
    %c144 = arith.constant 144 : index
    %30 = vector.load %arg7[%c0_20, %c144] : memref<64x512xbf16, #tpu.memory_space<vmem>>, vector<64x256xbf16>
    %31 = tpu.concatenate %28, %29, %30 in 0 : vector<64x256xbf16>, vector<64x256xbf16>, vector<64x256xbf16> -> vector<192x256xbf16>
    %c1 = arith.constant 1 : index
    %c0_21 = arith.constant 0 : index
    %c0_22 = arith.constant 0 : index
    %32 = vector.load %arg2[%c1, %c0_21, %c0_22] : memref<3x64x192xbf16, #tpu.memory_space<vmem>>, vector<1x64x192xbf16>
    %33 = vector.shape_cast %32 : vector<1x64x192xbf16> to vector<64x192xbf16>
    %cst_23 = arith.constant dense<0.000000e+00> : vector<64x256xf32>
    %34 = tpu.matmul %33, %31, %cst_23 {dimension_numbers = #tpu.dot_dimension_numbers<[1], [0], [0], [1], [0, 0, 1, 1], [], []>} : vector<64x192xbf16>, vector<192x256xbf16>, vector<64x256xf32> -> vector<64x256xf32>
    %35 = arith.addf %27, %34 : vector<64x256xf32>
    %c0_24 = arith.constant 0 : index
    %c113 = arith.constant 113 : index
    %36 = vector.load %arg7[%c0_24, %c113] : memref<64x512xbf16, #tpu.memory_space<vmem>>, vector<64x256xbf16>
    %c0_25 = arith.constant 0 : index
    %c129 = arith.constant 129 : index
    %37 = vector.load %arg7[%c0_25, %c129] : memref<64x512xbf16, #tpu.memory_space<vmem>>, vector<64x256xbf16>
    %c0_26 = arith.constant 0 : index
    %c145 = arith.constant 145 : index
    %38 = vector.load %arg7[%c0_26, %c145] : memref<64x512xbf16, #tpu.memory_space<vmem>>, vector<64x256xbf16>
    %39 = tpu.concatenate %36, %37, %38 in 0 : vector<64x256xbf16>, vector<64x256xbf16>, vector<64x256xbf16> -> vector<192x256xbf16>
    %cst_27 = arith.constant 0.000000e+00 : bf16
    %40 = vector.shape_cast %6 : vector<1x256xi1> to vector<1x256xi1>
    %41 = vector.broadcast %40 : vector<1x256xi1> to vector<192x256xi1>
    %42 = vector.broadcast %cst_27 : bf16 to vector<192x256xbf16>
    %43 = arith.select %41, %39, %42 : vector<192x256xi1>, vector<192x256xbf16>
    %c2 = arith.constant 2 : index
    %c0_28 = arith.constant 0 : index
    %c0_29 = arith.constant 0 : index
    %44 = vector.load %arg2[%c2, %c0_28, %c0_29] : memref<3x64x192xbf16, #tpu.memory_space<vmem>>, vector<1x64x192xbf16>
    %45 = vector.shape_cast %44 : vector<1x64x192xbf16> to vector<64x192xbf16>
    %cst_30 = arith.constant dense<0.000000e+00> : vector<64x256xf32>
    %46 = tpu.matmul %45, %43, %cst_30 {dimension_numbers = #tpu.dot_dimension_numbers<[1], [0], [0], [1], [0, 0, 1, 1], [], []>} : vector<64x192xbf16>, vector<192x256xbf16>, vector<64x256xf32> -> vector<64x256xf32>
    %47 = arith.addf %35, %46 : vector<64x256xf32>
    %c0_31 = arith.constant 0 : index
    %c0_32 = arith.constant 0 : index
    %48 = vector.load %arg3[%c0_31, %c0_32] : memref<64x1xf32, #tpu.memory_space<vmem>>, vector<64x1xf32>
    %49 = vector.broadcast %48 : vector<64x1xf32> to vector<64x256xf32>
    %50 = arith.addf %47, %49 : vector<64x256xf32>
    %cst_33 = arith.constant 0.000000e+00 : f32
    %51 = vector.broadcast %cst_33 : f32 to vector<64x256xf32>
    %52 = arith.maximumf %50, %51 : vector<64x256xf32>
    %53 = arith.truncf %52 : vector<64x256xf32> to vector<64x256xbf16>
    %c0_34 = arith.constant 0 : index
    %c128_35 = arith.constant 128 : index
    %54 = vector.load %arg7[%c0_34, %c128_35] : memref<64x512xbf16, #tpu.memory_space<vmem>>, vector<64x256xbf16>
    tpu.vector_store %arg7[%c0_34, %c128_35], %53 {strides = array<i32>} : memref<64x512xbf16, #tpu.memory_space<vmem>>, vector<64x256xbf16>,
    %cst_36 = arith.constant 0.000000e+00 : f32
    %55 = vector.broadcast %cst_36 : f32 to vector<64x256xf32>
    %c0_37 = arith.constant 0 : index
    %c111_38 = arith.constant 111 : index
    %56 = vector.load %arg7[%c0_37, %c111_38] : memref<64x512xbf16, #tpu.memory_space<vmem>>, vector<64x256xbf16>
    %c0_39 = arith.constant 0 : index
    %c127_40 = arith.constant 127 : index
    %57 = vector.load %arg7[%c0_39, %c127_40] : memref<64x512xbf16, #tpu.memory_space<vmem>>, vector<64x256xbf16>
    %c0_41 = arith.constant 0 : index
    %c143_42 = arith.constant 143 : index
    %58 = vector.load %arg7[%c0_41, %c143_42] : memref<64x512xbf16, #tpu.memory_space<vmem>>, vector<64x256xbf16>
    %59 = tpu.concatenate %56, %57, %58 in 0 : vector<64x256xbf16>, vector<64x256xbf16>, vector<64x256xbf16> -> vector<192x256xbf16>
    %cst_43 = arith.constant 0.000000e+00 : bf16
    %60 = vector.shape_cast %4 : vector<1x256xi1> to vector<1x256xi1>
    %61 = vector.broadcast %60 : vector<1x256xi1> to vector<192x256xi1>
    %62 = vector.broadcast %cst_43 : bf16 to vector<192x256xbf16>
    %63 = arith.select %61, %59, %62 : vector<192x256xi1>, vector<192x256xbf16>
    %c0_44 = arith.constant 0 : index
    %c0_45 = arith.constant 0 : index
    %c0_46 = arith.constant 0 : index
    %64 = vector.load %arg4[%c0_44, %c0_45, %c0_46] : memref<3x64x192xbf16, #tpu.memory_space<vmem>>, vector<1x64x192xbf16>
    %65 = vector.shape_cast %64 : vector<1x64x192xbf16> to vector<64x192xbf16>
    %cst_47 = arith.constant dense<0.000000e+00> : vector<64x256xf32>
    %66 = tpu.matmul %65, %63, %cst_47 {dimension_numbers = #tpu.dot_dimension_numbers<[1], [0], [0], [1], [0, 0, 1, 1], [], []>} : vector<64x192xbf16>, vector<192x256xbf16>, vector<64x256xf32> -> vector<64x256xf32>
    %67 = arith.addf %55, %66 : vector<64x256xf32>
    %c0_48 = arith.constant 0 : index
    %c112_49 = arith.constant 112 : index
    %68 = vector.load %arg7[%c0_48, %c112_49] : memref<64x512xbf16, #tpu.memory_space<vmem>>, vector<64x256xbf16>
    %c0_50 = arith.constant 0 : index
    %c128_51 = arith.constant 128 : index
    %69 = vector.load %arg7[%c0_50, %c128_51] : memref<64x512xbf16, #tpu.memory_space<vmem>>, vector<64x256xbf16>
    %c0_52 = arith.constant 0 : index
    %c144_53 = arith.constant 144 : index
    %70 = vector.load %arg7[%c0_52, %c144_53] : memref<64x512xbf16, #tpu.memory_space<vmem>>, vector<64x256xbf16>
    %71 = tpu.concatenate %68, %69, %70 in 0 : vector<64x256xbf16>, vector<64x256xbf16>, vector<64x256xbf16> -> vector<192x256xbf16>
    %c1_54 = arith.constant 1 : index
    %c0_55 = arith.constant 0 : index
    %c0_56 = arith.constant 0 : index
    %72 = vector.load %arg4[%c1_54, %c0_55, %c0_56] : memref<3x64x192xbf16, #tpu.memory_space<vmem>>, vector<1x64x192xbf16>
    %73 = vector.shape_cast %72 : vector<1x64x192xbf16> to vector<64x192xbf16>
    %cst_57 = arith.constant dense<0.000000e+00> : vector<64x256xf32>
    %74 = tpu.matmul %73, %71, %cst_57 {dimension_numbers = #tpu.dot_dimension_numbers<[1], [0], [0], [1], [0, 0, 1, 1], [], []>} : vector<64x192xbf16>, vector<192x256xbf16>, vector<64x256xf32> -> vector<64x256xf32>
    %75 = arith.addf %67, %74 : vector<64x256xf32>
    %c0_58 = arith.constant 0 : index
    %c113_59 = arith.constant 113 : index
    %76 = vector.load %arg7[%c0_58, %c113_59] : memref<64x512xbf16, #tpu.memory_space<vmem>>, vector<64x256xbf16>
    %c0_60 = arith.constant 0 : index
    %c129_61 = arith.constant 129 : index
    %77 = vector.load %arg7[%c0_60, %c129_61] : memref<64x512xbf16, #tpu.memory_space<vmem>>, vector<64x256xbf16>
    %c0_62 = arith.constant 0 : index
    %c145_63 = arith.constant 145 : index
    %78 = vector.load %arg7[%c0_62, %c145_63] : memref<64x512xbf16, #tpu.memory_space<vmem>>, vector<64x256xbf16>
    %79 = tpu.concatenate %76, %77, %78 in 0 : vector<64x256xbf16>, vector<64x256xbf16>, vector<64x256xbf16> -> vector<192x256xbf16>
    %cst_64 = arith.constant 0.000000e+00 : bf16
    %80 = vector.shape_cast %6 : vector<1x256xi1> to vector<1x256xi1>
    %81 = vector.broadcast %80 : vector<1x256xi1> to vector<192x256xi1>
    %82 = vector.broadcast %cst_64 : bf16 to vector<192x256xbf16>
    %83 = arith.select %81, %79, %82 : vector<192x256xi1>, vector<192x256xbf16>
    %c2_65 = arith.constant 2 : index
    %c0_66 = arith.constant 0 : index
    %c0_67 = arith.constant 0 : index
    %84 = vector.load %arg4[%c2_65, %c0_66, %c0_67] : memref<3x64x192xbf16, #tpu.memory_space<vmem>>, vector<1x64x192xbf16>
    %85 = vector.shape_cast %84 : vector<1x64x192xbf16> to vector<64x192xbf16>
    %cst_68 = arith.constant dense<0.000000e+00> : vector<64x256xf32>
    %86 = tpu.matmul %85, %83, %cst_68 {dimension_numbers = #tpu.dot_dimension_numbers<[1], [0], [0], [1], [0, 0, 1, 1], [], []>} : vector<64x192xbf16>, vector<192x256xbf16>, vector<64x256xf32> -> vector<64x256xf32>
    %87 = arith.addf %75, %86 : vector<64x256xf32>
    %c0_69 = arith.constant 0 : index
    %c0_70 = arith.constant 0 : index
    %88 = vector.load %arg5[%c0_69, %c0_70] : memref<64x1xf32, #tpu.memory_space<vmem>>, vector<64x1xf32>
    %89 = vector.broadcast %88 : vector<64x1xf32> to vector<64x256xf32>
    %90 = arith.addf %87, %89 : vector<64x256xf32>
    %91 = arith.addf %12, %90 : vector<64x256xf32>
    %c0_71 = arith.constant 0 : index
    %c0_72 = arith.constant 0 : index
    %c0_73 = arith.constant 0 : index
    %92 = vector.load %arg6[%c0_71, %c0_72, %c0_73] : memref<1x64x256xf32, #tpu.memory_space<vmem>>, vector<1x64x256xf32>
    %93 = vector.shape_cast %92 : vector<1x64x256xf32> to vector<64x256xf32>
    %94 = vector.shape_cast %91 : vector<64x256xf32> to vector<1x64x256xf32>
    tpu.vector_store %arg6[%c0_71, %c0_72, %c0_73], %94 {strides = array<i32>} : memref<1x64x256xf32, #tpu.memory_space<vmem>>, vector<1x64x256xf32>,
    return
  }
  func.func @transform_0(%arg0: i32) -> (i32, i32, i32) {
    %c0_i32 = arith.constant 0 : i32
    %c0_i32_0 = arith.constant 0 : i32
    %c0_i32_1 = arith.constant 0 : i32
    return %arg0, %c0_i32, %c0_i32_0 : i32, i32, i32
  }
  func.func @transform_1(%arg0: i32) -> (i32, i32, i32) {
    %c0_i32 = arith.constant 0 : i32
    %c0_i32_0 = arith.constant 0 : i32
    %c0_i32_1 = arith.constant 0 : i32
    %c0_i32_2 = arith.constant 0 : i32
    return %c0_i32, %c0_i32_0, %c0_i32_1 : i32, i32, i32
  }
  func.func @transform_2(%arg0: i32) -> (i32, i32) {
    %c0_i32 = arith.constant 0 : i32
    %c0_i32_0 = arith.constant 0 : i32
    %c0_i32_1 = arith.constant 0 : i32
    return %c0_i32, %c0_i32_0 : i32, i32
  }
  func.func @transform_3(%arg0: i32) -> (i32, i32, i32) {
    %c0_i32 = arith.constant 0 : i32
    %c0_i32_0 = arith.constant 0 : i32
    %c0_i32_1 = arith.constant 0 : i32
    %c0_i32_2 = arith.constant 0 : i32
    return %c0_i32, %c0_i32_0, %c0_i32_1 : i32, i32, i32
  }
  func.func @transform_4(%arg0: i32) -> (i32, i32) {
    %c0_i32 = arith.constant 0 : i32
    %c0_i32_0 = arith.constant 0 : i32
    %c0_i32_1 = arith.constant 0 : i32
    return %c0_i32, %c0_i32_0 : i32, i32
  }
  func.func @transform_5(%arg0: i32) -> (i32, i32, i32) {
    %c0_i32 = arith.constant 0 : i32
    %c0_i32_0 = arith.constant 0 : i32
    %c0_i32_1 = arith.constant 0 : i32
    return %arg0, %c0_i32, %c0_i32_0 : i32, i32, i32
  }
}

</mosaic_0001>

<llo_original>
// kernel: residual_block_nobn.1
$region0: #{residual_block_nobn.1}
  #allocation0 [shape = 'u32[]', space=smem, size = 0x4, offset = 0x4, fixed_abs, tag = 'smem constant byte address 0x4 - core index']
  #allocation1 [shape = 'u32[72,128]{1,0:T(1,128)}', space=vmem, size = 0x9000, scoped, tag = 'internal scratch']
  #allocation2 [shape = 'bf16[64,512]{1,0:T(8,128)(2,1)}', space=vmem, size = 0x10000, scoped, tag = 'scratch operand']
  %s0 = inlined_call_operand.vmem [shape: f32[2,64,256], index: 0, kind: input, shape index: {}]
  %s1 = inlined_call_operand.vmem [shape: bf16[3,64,192], index: 1, kind: input, shape index: {}]
  %s2 = inlined_call_operand.vmem [shape: f32[64,1], index: 2, kind: input, shape index: {}]
  %s3 = inlined_call_operand.vmem [shape: bf16[3,64,192], index: 3, kind: input, shape index: {}]
  %s4 = inlined_call_operand.vmem [shape: f32[64,1], index: 4, kind: input, shape index: {}]
  %s5 = inlined_call_operand.vmem [shape: f32[2,64,256], index: 5, kind: output, shape index: {}]
  %s6 = sld [smem:[#allocation0]]
  $region53: #{residual_block_nobn.1} parent=0
    _
  %s8 = ssub.s32 1, %s6
  %s9 = scalar_select 0, %s8, %s6
  loop: start=0, step=1, limit=4
  $region2: #{residual_block_nobn.1} parent=0 // loop_pre_header
    _
  $region3: #{residual_block_nobn.1} parent=0 // loop_header
    %s11 = sphi 0, %s15
    %p12 = scmp.ge.s32.totalorder %s11, 4
    %s21 = sphi 0, %s23
    %s24 = sphi 0, %s21
    %s25 = sphi 0, %s24
    %s41 = sphi 0, %s25
    %s45 = sphi 0, %s45
    %s47 = sphi 0, %s45
    %s48 = sphi 0, %s47
    %s62 = sphi 0, %s48
    %s66 = sphi 0, %s66
    %s68 = sphi 0, %s66
    %s69 = sphi 0, %s68
    %s83 = sphi 0, %s69
    %s87 = sphi 0, %s87
    %s89 = sphi 0, %s87
    %s90 = sphi 0, %s89
    %s104 = sphi 0, %s90
    %s108 = sphi 0, %s108
    %s110 = sphi 0, %s108
    %s111 = sphi 0, %s110
    %s125 = sphi 0, %s111
    %s131 = sphi 0, %s133
    %s134 = sphi 0, %s131
    %s135 = sphi 0, %s134
    %s151 = sphi 0, %s135
  $region4: #{residual_block_nobn.1} parent=0 // loop_header_branch
    %14 = sbr.rel (%p12) target = $region8
  $region5: #{residual_block_nobn.1} parent=0 // loop_body
    %s16 = ssub.s32 %s11, 1
    %s17 = ssub.s32 %s11, 2
    %s18 = sadd.s32 %s11, 1
    %s19 = ssub.s32 %s11, %s18
    %p20 = scmp.eq.s32.totalorder %s19, 0
    %s22 = sadd.s32 %s21, 1
    %s23 = scalar_select %p20, %s21, %s22
    %p26 = pneg %p20
    %p27 = scmp.eq.s32.totalorder %s11, 1
    %p28 = por %p26, %p27
    %p29 = scmp.ne.s32.totalorder %s21, %s24
    %p30 = scmp.eq.s32.totalorder %s11, 0
    %p31 = por %p29, %p30
    %p32 = scmp.ne.s32.totalorder %s21, %s24
    %p33 = scmp.eq.s32.totalorder %s16, 1
    %p34 = por %p32, %p33
    %p35 = scmp.ne.s32.totalorder %s24, %s25
    %p36 = scmp.eq.s32.totalorder %s16, 0
    %p37 = por %p35, %p36
    %p38 = scmp.ne.s32.totalorder %s24, %s25
    %p39 = scmp.eq.s32.totalorder %s17, 1
    %p40 = por %p38, %p39
    %p42 = scmp.ne.s32.totalorder %s25, %s41
    %p43 = scmp.eq.s32.totalorder %s17, 0
    %p44 = por %p42, %p43
    %s46 = sadd.s32 %s45, 1
    %p49 = scmp.eq.s32.totalorder %s11, 1
    %p50 = scmp.ne.s32.totalorder %s45, %s47
    %p51 = scmp.eq.s32.totalorder %s11, 0
    %p52 = por %p50, %p51
    %p53 = scmp.ne.s32.totalorder %s45, %s47
    %p54 = scmp.eq.s32.totalorder %s16, 1
    %p55 = por %p53, %p54
    %p56 = scmp.ne.s32.totalorder %s47, %s48
    %p57 = scmp.eq.s32.totalorder %s16, 0
    %p58 = por %p56, %p57
    %p59 = scmp.ne.s32.totalorder %s47, %s48
    %p60 = scmp.eq.s32.totalorder %s17, 1
    %p61 = por %p59, %p60
    %p63 = scmp.ne.s32.totalorder %s48, %s62
    %p64 = scmp.eq.s32.totalorder %s17, 0
    %p65 = por %p63, %p64
    %s67 = sadd.s32 %s66, 1
    %p70 = scmp.eq.s32.totalorder %s11, 1
    %p71 = scmp.ne.s32.totalorder %s66, %s68
    %p72 = scmp.eq.s32.totalorder %s11, 0
    %p73 = por %p71, %p72
    %p74 = scmp.ne.s32.totalorder %s66, %s68
    %p75 = scmp.eq.s32.totalorder %s16, 1
    %p76 = por %p74, %p75
    %p77 = scmp.ne.s32.totalorder %s68, %s69
    %p78 = scmp.eq.s32.totalorder %s16, 0
    %p79 = por %p77, %p78
    %p80 = scmp.ne.s32.totalorder %s68, %s69
    %p81 = scmp.eq.s32.totalorder %s17, 1
    %p82 = por %p80, %p81
    %p84 = scmp.ne.s32.totalorder %s69, %s83
    %p85 = scmp.eq.s32.totalorder %s17, 0
    %p86 = por %p84, %p85
    %s88 = sadd.s32 %s87, 1
    %p91 = scmp.eq.s32.totalorder %s11, 1
    %p92 = scmp.ne.s32.totalorder %s87, %s89
    %p93 = scmp.eq.s32.totalorder %s11, 0
    %p94 = por %p92, %p93
    %p95 = scmp.ne.s32.totalorder %s87, %s89
    %p96 = scmp.eq.s32.totalorder %s16, 1
    %p97 = por %p95, %p96
    %p98 = scmp.ne.s32.totalorder %s89, %s90
    %p99 = scmp.eq.s32.totalorder %s16, 0
    %p100 = por %p98, %p99
    %p101 = scmp.ne.s32.totalorder %s89, %s90
    %p102 = scmp.eq.s32.totalorder %s17, 1
    %p103 = por %p101, %p102
    %p105 = scmp.ne.s32.totalorder %s90, %s104
    %p106 = scmp.eq.s32.totalorder %s17, 0
    %p107 = por %p105, %p106
    %s109 = sadd.s32 %s108, 1
    %p112 = scmp.eq.s32.totalorder %s11, 1
    %p113 = scmp.ne.s32.totalorder %s108, %s110
    %p114 = scmp.eq.s32.totalorder %s11, 0
    %p115 = por %p113, %p114
    %p116 = scmp.ne.s32.totalorder %s108, %s110
    %p117 = scmp.eq.s32.totalorder %s16, 1
    %p118 = por %p116, %p117
    %p119 = scmp.ne.s32.totalorder %s110, %s111
    %p120 = scmp.eq.s32.totalorder %s16, 0
    %p121 = por %p119, %p120
    %p122 = scmp.ne.s32.totalorder %s110, %s111
    %p123 = scmp.eq.s32.totalorder %s17, 1
    %p124 = por %p122, %p123
    %p126 = scmp.ne.s32.totalorder %s111, %s125
    %p127 = scmp.eq.s32.totalorder %s17, 0
    %p128 = por %p126, %p127
    %s129 = ssub.s32 %s11, %s18
    %p130 = scmp.eq.s32.totalorder %s129, 0
    %s132 = sadd.s32 %s131, 1
    %s133 = scalar_select %p130, %s131, %s132
    %p136 = pneg %p130
    %p137 = scmp.eq.s32.totalorder %s11, 1
    %p138 = por %p136, %p137
    %p139 = scmp.ne.s32.totalorder %s131, %s134
    %p140 = scmp.eq.s32.totalorder %s11, 0
    %p141 = por %p139, %p140
    %p142 = scmp.ne.s32.totalorder %s131, %s134
    %p143 = scmp.eq.s32.totalorder %s16, 1
    %p144 = por %p142, %p143
    %p145 = scmp.ne.s32.totalorder %s134, %s135
    %p146 = scmp.eq.s32.totalorder %s16, 0
    %p147 = por %p145, %p146
    %p148 = scmp.ne.s32.totalorder %s134, %s135
    %p149 = scmp.eq.s32.totalorder %s17, 1
    %p150 = por %p148, %p149
    %p152 = scmp.ne.s32.totalorder %s135, %s151
    %p153 = scmp.eq.s32.totalorder %s17, 0
    %p154 = por %p152, %p153
    %p155 = scmp.le.s32.totalorder 1, %s11
    %p156 = scmp.lt.s32.totalorder %s11, 3
    %p157 = pnand %p155, %p156
    %p158 = pneg %p157
    // Predicated region
    $region9: #{residual_block_nobn.1} parent=5 // pred_check
      _
    $region10: #{residual_block_nobn.1} parent=5 // pred_check_branch
      %160 = sbr.rel (%p157) target = $region12
    $region11: #{residual_block_nobn.1} parent=5 // pred_region
      %s161 = ssub.s32 %s11, 1
      // Predicated region
      $region13: #{residual_block_nobn.1} parent=11 // pred_check
        %p162 = pneg %p58
      $region14: #{residual_block_nobn.1} parent=11 // pred_check_branch
        %164 = sbr.rel (%p162) target = $region16
      $region15: #{residual_block_nobn.1} parent=11 // pred_region
        _
      $region16: #{residual_block_nobn.1} parent=11 // pred_fallthru
        _
      // Predicated region
      $region17: #{residual_block_nobn.1} parent=11 // pred_check
        %p165 = pneg %p79
      $region18: #{residual_block_nobn.1} parent=11 // pred_check_branch
        %167 = sbr.rel (%p165) target = $region20
      $region19: #{residual_block_nobn.1} parent=11 // pred_region
        _
      $region20: #{residual_block_nobn.1} parent=11 // pred_fallthru
        _
      // Predicated region
      $region21: #{residual_block_nobn.1} parent=11 // pred_check
        %p168 = pneg %p100
      $region22: #{residual_block_nobn.1} parent=11 // pred_check_branch
        %170 = sbr.rel (%p168) target = $region24
      $region23: #{residual_block_nobn.1} parent=11 // pred_region
        _
      $region24: #{residual_block_nobn.1} parent=11 // pred_fallthru
        _
      // Predicated region
      $region25: #{residual_block_nobn.1} parent=11 // pred_check
        %p171 = pneg %p121
      $region26: #{residual_block_nobn.1} parent=11 // pred_check_branch
        %173 = sbr.rel (%p171) target = $region28
      $region27: #{residual_block_nobn.1} parent=11 // pred_region
        _
      $region28: #{residual_block_nobn.1} parent=11 // pred_fallthru
        _
    $region12: #{residual_block_nobn.1} parent=5 // pred_fallthru
      _
    %p174 = scmp.lt.s32.totalorder %s11, 2
    // Predicated region
    $region29: #{residual_block_nobn.1} parent=5 // pred_check
      %p175 = pneg %p174
    $region30: #{residual_block_nobn.1} parent=5 // pred_check_branch
      %177 = sbr.rel (%p175) target = $region32
    $region31: #{residual_block_nobn.1} parent=5 // pred_region
      // Predicated region
      $region33: #{residual_block_nobn.1} parent=31 // pred_check
        %p178 = pneg %p31
      $region34: #{residual_block_nobn.1} parent=31 // pred_check_branch
        %180 = sbr.rel (%p178) target = $region36
      $region35: #{residual_block_nobn.1} parent=31 // pred_region
        %p181 = scmp.lt.s32.totalorder %s11, 1
        %s182 = scalar_select %p181, %s11, 1
        %s183 = smul.addr %s182, 16
        %s184 = smul.addr %s183, 8
        %s185 = scalar_lea.vmem %s0, %s184
      $region36: #{residual_block_nobn.1} parent=31 // pred_fallthru
        _
    $region32: #{residual_block_nobn.1} parent=5 // pred_fallthru
      _
    %p186 = scmp.le.s32.totalorder 1, %s11
    %p187 = scmp.lt.s32.totalorder %s11, 3
    %p188 = pnand %p186, %p187
    %p189 = pneg %p188
    // Predicated region
    $region37: #{residual_block_nobn.1} parent=5 // pred_check
      _
    $region38: #{residual_block_nobn.1} parent=5 // pred_check_branch
      %191 = sbr.rel (%p188) target = $region40
    $region39: #{residual_block_nobn.1} parent=5 // pred_region
      %s192 = ssub.s32 %s11, 1
      %p193 = scmp.lt.s32.totalorder %s16, 1
      %s194 = scalar_select %p193, %s16, 1
      %s195 = smul.addr %s194, 16
      %s196 = smul.addr %s195, 8
      %s197 = scalar_lea.vmem %s0, %s196
      %p198 = pneg %p37
      %p199 = pneg %p34
      %p200 = pneg %p58
      %p201 = pneg %p55
      %p202 = pneg %p79
      %p203 = pneg %p76
      %p204 = pneg %p100
      %p205 = pneg %p97
      %p206 = pneg %p121
      %p207 = pneg %p118
      %p208 = pneg %p147
      %p209 = pneg %p144
      %p210 = scmp.lt.s32.totalorder %s16, 1
      %s211 = scalar_select %p210, %s16, 1
      %s212 = smul.addr %s211, 16
      %s213 = smul.addr %s212, 8
      %s214 = scalar_lea.vmem %s5, %s213
      %p215 = scmp.lt.s32.totalorder %s16, 1
      %s216 = scalar_select %p215, %s16, 1
      %s217 = smul.addr %s216, 16
      %s218 = smul.addr %s217, 8
      %s219 = scalar_lea.vmem %s0, %s218
      %p220 = scmp.lt.s32.totalorder %s16, 1
      %s221 = scalar_select %p220, %s16, 1
      %s222 = smul.addr %s221, 16
      %s223 = smul.addr %s222, 8
      %s224 = scalar_lea.vmem %s5, %s223
      %v228 = vlaneseq
      %v229 = vand.u32 %v228, 127
      %v230 = vadd.s32 %v229, 128
      %v231 = vand.u32 %v229, 15
      %v232 = vand.u32 %v230, 15
      %vm233 = vcmp.ne.s32.totalorder %v231, 0
      %vm234 = vcmp.ne.s32.totalorder %v232, 0
      %vm235 = vcmp.ne.s32.totalorder %v231, 15
      %vm236 = vcmp.ne.s32.totalorder %v232, 15
      %237 = vst [vmem:[#allocation2] sm:$0xf] 0
      %238 = vst [vmem:[#allocation2 + $0x10] sm:$0xf] 0
      %239 = vst [vmem:[#allocation2 + $0x20] sm:$0xf] 0
      %240 = vst [vmem:[#allocation2 + $0x30] sm:$0xf] 0
      %241 = vst [vmem:[#allocation2 + $0x40] sm:$0xf] 0
      %242 = vst [vmem:[#allocation2 + $0x50] sm:$0xf] 0
      %243 = vst [vmem:[#allocation2 + $0x60] sm:$0xf] 0
      %244 = vst [vmem:[#allocation2 + $0x70] sm:$0xf] 0
      %245 = vst [vmem:[#allocation2 + $0xc] sm:$0xf] 0
      %246 = vst [vmem:[#allocation2 + $0x1c] sm:$0xf] 0
      %247 = vst [vmem:[#allocation2 + $0x2c] sm:$0xf] 0
      %248 = vst [vmem:[#allocation2 + $0x3c] sm:$0xf] 0
      %249 = vst [vmem:[#allocation2 + $0x4c] sm:$0xf] 0
      %250 = vst [vmem:[#allocation2 + $0x5c] sm:$0xf] 0
      %251 = vst [vmem:[#allocation2 + $0x6c] sm:$0xf] 0
      %252 = vst [vmem:[#allocation2 + $0x7c] sm:$0xf] 0
      %v253 = vld [vmem:[%s219] sm:$0xff]
      %v254 = vld [vmem:[%s219 + $0x8] sm:$0xff]
      %v255 = vld [vmem:[%s219 + $0x10] sm:$0xff]
      %v256 = vld [vmem:[%s219 + $0x18] sm:$0xff]
      %v257 = vld [vmem:[%s219 + $0x20] sm:$0xff]
      %v258 = vld [vmem:[%s219 + $0x28] sm:$0xff]
      %v259 = vld [vmem:[%s219 + $0x30] sm:$0xff]
      %v260 = vld [vmem:[%s219 + $0x38] sm:$0xff]
      %v261 = vld [vmem:[%s219 + $0x40] sm:$0xff]
      %v262 = vld [vmem:[%s219 + $0x48] sm:$0xff]
      %v263 = vld [vmem:[%s219 + $0x50] sm:$0xff]
      %v264 = vld [vmem:[%s219 + $0x58] sm:$0xff]
      %v265 = vld [vmem:[%s219 + $0x60] sm:$0xff]
      %v266 = vld [vmem:[%s219 + $0x68] sm:$0xff]
      %v267 = vld [vmem:[%s219 + $0x70] sm:$0xff]
      %v268 = vld [vmem:[%s219 + $0x78] sm:$0xff]
      %v269 = vpack.c.bf16 %v254, %v253
      %v270 = vpack.c.bf16 %v256, %v255
      %v271 = vpack.c.bf16 %v258, %v257
      %v272 = vpack.c.bf16 %v260, %v259
      %v273 = vpack.c.bf16 %v262, %v261
      %v274 = vpack.c.bf16 %v264, %v263
      %v275 = vpack.c.bf16 %v266, %v265
      %v276 = vpack.c.bf16 %v268, %v267
      %277 = vst [vmem:[#allocation2 + $0x4] sm:$0xff] %v269
      %278 = vst [vmem:[#allocation2 + $0x14] sm:$0xff] %v270
      %279 = vst [vmem:[#allocation2 + $0x24] sm:$0xff] %v271
      %280 = vst [vmem:[#allocation2 + $0x34] sm:$0xff] %v272
      %281 = vst [vmem:[#allocation2 + $0x44] sm:$0xff] %v273
      %282 = vst [vmem:[#allocation2 + $0x54] sm:$0xff] %v274
      %283 = vst [vmem:[#allocation2 + $0x64] sm:$0xff] %v275
      %284 = vst [vmem:[#allocation2 + $0x74] sm:$0xff] %v276
      %v285 = vld [vmem:[#allocation2] sm:$0xff]
      %v286 = vld [vmem:[#allocation2 + $0x8] sm:$0xf]
      %v287 = vld [vmem:[#allocation2 + $0x10] sm:$0xff]
      %v288 = vld [vmem:[#allocation2 + $0x18] sm:$0xf]
      %v289 = vld [vmem:[#allocation2 + $0x20] sm:$0xff]
      %v290 = vld [vmem:[#allocation2 + $0x28] sm:$0xf]
      %v291 = vld [vmem:[#allocation2 + $0x30] sm:$0xff]
      %v292 = vld [vmem:[#allocation2 + $0x38] sm:$0xf]
      %v293 = vld [vmem:[#allocation2 + $0x40] sm:$0xff]
      %v294 = vld [vmem:[#allocation2 + $0x48] sm:$0xf]
      %v295 = vld [vmem:[#allocation2 + $0x50] sm:$0xff]
      %v296 = vld [vmem:[#allocation2 + $0x58] sm:$0xf]
      %v297 = vld [vmem:[#allocation2 + $0x60] sm:$0xff]
      %v298 = vld [vmem:[#allocation2 + $0x68] sm:$0xf]
      %v299 = vld [vmem:[#allocation2 + $0x70] sm:$0xff]
      %v300 = vld [vmem:[#allocation2 + $0x78] sm:$0xf]
      %v301 = vld [vmem:[#allocation2 + $0x4] sm:$0xff]
      %v302 = vld [vmem:[#allocation2 + $0xc] sm:$0xf]
      %v303 = vld [vmem:[#allocation2 + $0x14] sm:$0xff]
      %v304 = vld [vmem:[#allocation2 + $0x1c] sm:$0xf]
      %v305 = vld [vmem:[#allocation2 + $0x24] sm:$0xff]
      %v306 = vld [vmem:[#allocation2 + $0x2c] sm:$0xf]
      %v307 = vld [vmem:[#allocation2 + $0x34] sm:$0xff]
      %v308 = vld [vmem:[#allocation2 + $0x3c] sm:$0xf]
      %v309 = vld [vmem:[#allocation2 + $0x44] sm:$0xff]
      %v310 = vld [vmem:[#allocation2 + $0x4c] sm:$0xf]
      %v311 = vld [vmem:[#allocation2 + $0x54] sm:$0xff]
      %v312 = vld [vmem:[#allocation2 + $0x5c] sm:$0xf]
      %v313 = vld [vmem:[#allocation2 + $0x64] sm:$0xff]
      %v314 = vld [vmem:[#allocation2 + $0x6c] sm:$0xf]
      %v315 = vld [vmem:[#allocation2 + $0x74] sm:$0xff]
      %v316 = vld [vmem:[#allocation2 + $0x7c] sm:$0xf]
      %v333 = vunpack.c.l.b16 %v285
      %v334 = vunpack.c.h.b16 %v285
      %v335 = vunpack.c.l.b16 %v286
      %v336 = vunpack.c.l.b16 %v287
      %v337 = vunpack.c.h.b16 %v287
      %v338 = vunpack.c.l.b16 %v288
      %v339 = vunpack.c.l.b16 %v289
      %v340 = vunpack.c.h.b16 %v289
      %v341 = vunpack.c.l.b16 %v290
      %v342 = vunpack.c.l.b16 %v291
      %v343 = vunpack.c.h.b16 %v291
      %v344 = vunpack.c.l.b16 %v292
      %v345 = vunpack.c.l.b16 %v293
      %v346 = vunpack.c.h.b16 %v293
      %v347 = vunpack.c.l.b16 %v294
      %v348 = vunpack.c.l.b16 %v295
      %v349 = vunpack.c.h.b16 %v295
      %v350 = vunpack.c.l.b16 %v296
      %v351 = vunpack.c.l.b16 %v297
      %v352 = vunpack.c.h.b16 %v297
      %v353 = vunpack.c.l.b16 %v298
      %v354 = vunpack.c.l.b16 %v299
      %v355 = vunpack.c.h.b16 %v299
      %v356 = vunpack.c.l.b16 %v300
      %v357 = vpack.c.b16 %v336, %v333
      %v358 = vpack.c.b16 %v337, %v334
      %v359 = vpack.c.b16 %v338, %v335
      %v360 = vpack.c.b16 %v342, %v339
      %v361 = vpack.c.b16 %v343, %v340
      %v362 = vpack.c.b16 %v344, %v341
      %v363 = vpack.c.b16 %v348, %v345
      %v364 = vpack.c.b16 %v349, %v346
      %v365 = vpack.c.b16 %v350, %v347
      %v366 = vpack.c.b16 %v354, %v351
      %v367 = vpack.c.b16 %v355, %v352
      %v368 = vpack.c.b16 %v356, %v353
      %381 = vrot.lane.b32.xlu0 %v357, 112
      %v382 = vpop.permute.xlu0 %381
      %383 = vrot.lane.b32.xlu0 %v358, 112
      %v384 = vpop.permute.xlu0 %383
      %385 = vrot.lane.b32.xlu0 %v359, 112
      %v386 = vpop.permute.xlu0 %385
      %387 = vrot.lane.b32.xlu0 %v360, 112
      %v388 = vpop.permute.xlu0 %387
      %389 = vrot.lane.b32.xlu0 %v361, 112
      %v390 = vpop.permute.xlu0 %389
      %391 = vrot.lane.b32.xlu0 %v362, 112
      %v392 = vpop.permute.xlu0 %391
      %393 = vrot.lane.b32.xlu0 %v363, 112
      %v394 = vpop.permute.xlu0 %393
      %395 = vrot.lane.b32.xlu0 %v364, 112
      %v396 = vpop.permute.xlu0 %395
      %397 = vrot.lane.b32.xlu0 %v365, 112
      %v398 = vpop.permute.xlu0 %397
      %399 = vrot.lane.b32.xlu0 %v366, 112
      %v400 = vpop.permute.xlu0 %399
      %401 = vrot.lane.b32.xlu0 %v367, 112
      %v402 = vpop.permute.xlu0 %401
      %403 = vrot.lane.b32.xlu0 %v368, 112
      %v404 = vpop.permute.xlu0 %403
      %vm405 = vcmask 916480
      %v406 = vsel %vm405, %v382, %v384
      %v407 = vsel %vm405, %v384, %v386
      %v408 = vsel %vm405, %v388, %v390
      %v409 = vsel %vm405, %v390, %v392
      %v410 = vsel %vm405, %v394, %v396
      %v411 = vsel %vm405, %v396, %v398
      %v412 = vsel %vm405, %v400, %v402
      %v413 = vsel %vm405, %v402, %v404
      %v442 = vunpack.c.l.b16 %v301
      %v443 = vunpack.c.h.b16 %v301
      %v444 = vunpack.c.l.b16 %v302
      %v445 = vunpack.c.l.b16 %v303
      %v446 = vunpack.c.h.b16 %v303
      %v447 = vunpack.c.l.b16 %v304
      %v448 = vunpack.c.l.b16 %v305
      %v449 = vunpack.c.h.b16 %v305
      %v450 = vunpack.c.l.b16 %v306
      %v451 = vunpack.c.l.b16 %v307
      %v452 = vunpack.c.h.b16 %v307
      %v453 = vunpack.c.l.b16 %v308
      %v454 = vunpack.c.l.b16 %v309
      %v455 = vunpack.c.h.b16 %v309
      %v456 = vunpack.c.l.b16 %v310
      %v457 = vunpack.c.l.b16 %v311
      %v458 = vunpack.c.h.b16 %v311
      %v459 = vunpack.c.l.b16 %v312
      %v460 = vunpack.c.l.b16 %v313
      %v461 = vunpack.c.h.b16 %v313
      %v462 = vunpack.c.l.b16 %v314
      %v463 = vunpack.c.l.b16 %v315
      %v464 = vunpack.c.h.b16 %v315
      %v465 = vunpack.c.l.b16 %v316
      %v466 = vpack.c.b16 %v445, %v442
      %v467 = vpack.c.b16 %v446, %v443
      %v468 = vpack.c.b16 %v447, %v444
      %v469 = vpack.c.b16 %v451, %v448
      %v470 = vpack.c.b16 %v452, %v449
      %v471 = vpack.c.b16 %v453, %v450
      %v472 = vpack.c.b16 %v457, %v454
      %v473 = vpack.c.b16 %v458, %v455
      %v474 = vpack.c.b16 %v459, %v456
      %v475 = vpack.c.b16 %v463, %v460
      %v476 = vpack.c.b16 %v464, %v461
      %v477 = vpack.c.b16 %v465, %v462
      %478 = vrot.lane.b32.xlu0 %v466, 96
      %v479 = vpop.permute.xlu0 %478
      %480 = vrot.lane.b32.xlu0 %v467, 96
      %v481 = vpop.permute.xlu0 %480
      %482 = vrot.lane.b32.xlu0 %v468, 96
      %v483 = vpop.permute.xlu0 %482
      %484 = vrot.lane.b32.xlu0 %v469, 96
      %v485 = vpop.permute.xlu0 %484
      %486 = vrot.lane.b32.xlu0 %v470, 96
      %v487 = vpop.permute.xlu0 %486
      %488 = vrot.lane.b32.xlu0 %v471, 96
      %v489 = vpop.permute.xlu0 %488
      %490 = vrot.lane.b32.xlu0 %v472, 96
      %v491 = vpop.permute.xlu0 %490
      %492 = vrot.lane.b32.xlu0 %v473, 96
      %v493 = vpop.permute.xlu0 %492
      %494 = vrot.lane.b32.xlu0 %v474, 96
      %v495 = vpop.permute.xlu0 %494
      %496 = vrot.lane.b32.xlu0 %v475, 96
      %v497 = vpop.permute.xlu0 %496
      %498 = vrot.lane.b32.xlu0 %v476, 96
      %v499 = vpop.permute.xlu0 %498
      %500 = vrot.lane.b32.xlu0 %v477, 96
      %v501 = vpop.permute.xlu0 %500
      %vm502 = vcmask 785408
      %v503 = vsel %vm502, %v479, %v481
      %v504 = vsel %vm502, %v481, %v483
      %v505 = vsel %vm502, %v485, %v487
      %v506 = vsel %vm502, %v487, %v489
      %v507 = vsel %vm502, %v491, %v493
      %v508 = vsel %vm502, %v493, %v495
      %v509 = vsel %vm502, %v497, %v499
      %v510 = vsel %vm502, %v499, %v501
      %v523 = vsel %vm233, 1, 0
      %v524 = vsel %vm234, 1, 0
      %vm525 = vcmp.eq.s32.totalorder %v523, 1
      %vm526 = vcmp.eq.s32.totalorder %v524, 1
      %vm527 = vmpackc.low %vm526, %vm525
      %v528 = vsel %vm527, 65537, 0
      %v529 = vperm.slane %v528, 0
      %v530 = vperm.slane %v528, 4
      %531 = vrot.lane.b32.xlu0 %v529, 111
      %v532 = vpop.permute.xlu0 %531
      %533 = vrot.lane.b32.xlu0 %v530, 111
      %v534 = vpop.permute.xlu0 %533
      %vm535 = vcmask 908288
      %v536 = vsel %vm535, %v532, %v534
      %v537 = vunpack.c.l.b16 %v532
      %v538 = vunpack.c.h.b16 %v532
      %v539 = vunpack.c.l.b16 0
      %v540 = vunpack.c.h.b16 0
      %vm541 = vcmp.ne.s32.totalorder %v537, %v539
      %vm542 = vcmp.ne.s32.totalorder %v538, %v540
      %vm543 = vmpackc.low %vm542, %vm541
      %v544 = vunpack.c.l.b16 %v536
      %v545 = vunpack.c.h.b16 %v536
      %v546 = vunpack.c.l.b16 0
      %v547 = vunpack.c.h.b16 0
      %vm548 = vcmp.ne.s32.totalorder %v544, %v546
      %vm549 = vcmp.ne.s32.totalorder %v545, %v547
      %vm550 = vmpackc.low %vm549, %vm548
      %v551 = vunpack.c.l.b16 %v534
      %v552 = vunpack.c.h.b16 %v534
      %v553 = vunpack.c.l.b16 0
      %v554 = vunpack.c.h.b16 0
      %vm555 = vcmp.ne.s32.totalorder %v551, %v553
      %vm556 = vcmp.ne.s32.totalorder %v552, %v554
      %vm557 = vmpackc.low %vm556, %vm555
      %v558 = vsel %vm543, %v357, 0
      %v559 = vsel %vm550, %v358, 0
      %v560 = vsel %vm557, %v359, 0
      %v561 = vsel %vm543, %v360, 0
      %v562 = vsel %vm550, %v361, 0
      %v563 = vsel %vm557, %v362, 0
      %v564 = vsel %vm543, %v363, 0
      %v565 = vsel %vm550, %v364, 0
      %v566 = vsel %vm557, %v365, 0
      %v567 = vsel %vm543, %v366, 0
      %v568 = vsel %vm550, %v367, 0
      %v569 = vsel %vm557, %v368, 0
      %v570 = vsel %vm543, %v406, 0
      %v571 = vsel %vm550, %v407, 0
      %v572 = vsel %vm557, %v386, 0
      %v573 = vsel %vm543, %v408, 0
      %v574 = vsel %vm550, %v409, 0
      %v575 = vsel %vm557, %v392, 0
      %v576 = vsel %vm543, %v410, 0
      %v577 = vsel %vm550, %v411, 0
      %v578 = vsel %vm557, %v398, 0
      %v579 = vsel %vm543, %v412, 0
      %v580 = vsel %vm550, %v413, 0
      %v581 = vsel %vm557, %v404, 0
      %v582 = vsel %vm543, %v479, 0
      %v583 = vsel %vm550, %v503, 0
      %v584 = vsel %vm557, %v504, 0
      %v585 = vsel %vm543, %v485, 0
      %v586 = vsel %vm550, %v505, 0
      %v587 = vsel %vm557, %v506, 0
      %v588 = vsel %vm543, %v491, 0
      %v589 = vsel %vm550, %v507, 0
      %v590 = vsel %vm557, %v508, 0
      %v591 = vsel %vm543, %v497, 0
      %v592 = vsel %vm550, %v509, 0
      %v593 = vsel %vm557, %v510, 0
      %v594 = vld [vmem:[%s1] sm:$0xff]
      %v595 = vld [vmem:[%s1 + $0x8] sm:$0xff]
      %v596 = vld [vmem:[%s1 + $0x10] sm:$0xff]
      %v597 = vld [vmem:[%s1 + $0x18] sm:$0xff]
      %v598 = vld [vmem:[%s1 + $0x20] sm:$0xff]
      %v599 = vld [vmem:[%s1 + $0x28] sm:$0xff]
      %v600 = vld [vmem:[%s1 + $0x30] sm:$0xff]
      %v601 = vld [vmem:[%s1 + $0x38] sm:$0xff]
      %v602 = vld [vmem:[#allocation2 + $0x4] sm:$0xff]
      %v603 = vld [vmem:[#allocation2 + $0x14] sm:$0xff]
      %v604 = vld [vmem:[#allocation2 + $0x24] sm:$0xff]
      %v605 = vld [vmem:[#allocation2 + $0x34] sm:$0xff]
      %v606 = vld [vmem:[#allocation2 + $0x44] sm:$0xff]
      %v607 = vld [vmem:[#allocation2 + $0x54] sm:$0xff]
      %v608 = vld [vmem:[#allocation2 + $0x64] sm:$0xff]
      %v609 = vld [vmem:[#allocation2 + $0x74] sm:$0xff]
      %v618 = vunpack.c.l.b16 %v602
      %v619 = vunpack.c.h.b16 %v602
      %v620 = vunpack.c.l.b16 %v603
      %v621 = vunpack.c.h.b16 %v603
      %v622 = vunpack.c.l.b16 %v604
      %v623 = vunpack.c.h.b16 %v604
      %v624 = vunpack.c.l.b16 %v605
      %v625 = vunpack.c.h.b16 %v605
      %v626 = vunpack.c.l.b16 %v606
      %v627 = vunpack.c.h.b16 %v606
      %v628 = vunpack.c.l.b16 %v607
      %v629 = vunpack.c.h.b16 %v607
      %v630 = vunpack.c.l.b16 %v608
      %v631 = vunpack.c.h.b16 %v608
      %v632 = vunpack.c.l.b16 %v609
      %v633 = vunpack.c.h.b16 %v609
      %v634 = vpack.c.b16 %v620, %v618
      %v635 = vpack.c.b16 %v621, %v619
      %v636 = vpack.c.b16 %v624, %v622
      %v637 = vpack.c.b16 %v625, %v623
      %v638 = vpack.c.b16 %v628, %v626
      %v639 = vpack.c.b16 %v629, %v627
      %v640 = vpack.c.b16 %v632, %v630
      %v641 = vpack.c.b16 %v633, %v631
      %642 = vrot.lane.b32.xlu0 %v634, 112
      %v643 = vpop.permute.xlu0 %642
      %644 = vrot.lane.b32.xlu0 %v635, 112
      %v645 = vpop.permute.xlu0 %644
      %646 = vrot.lane.b32.xlu0 %v636, 112
      %v647 = vpop.permute.xlu0 %646
      %648 = vrot.lane.b32.xlu0 %v637, 112
      %v649 = vpop.permute.xlu0 %648
      %650 = vrot.lane.b32.xlu0 %v638, 112
      %v651 = vpop.permute.xlu0 %650
      %652 = vrot.lane.b32.xlu0 %v639, 112
      %v653 = vpop.permute.xlu0 %652
      %654 = vrot.lane.b32.xlu0 %v640, 112
      %v655 = vpop.permute.xlu0 %654
      %656 = vrot.lane.b32.xlu0 %v641, 112
      %v657 = vpop.permute.xlu0 %656
      %v658 = vsel %vm405, %v643, %v645
      %v659 = vsel %vm405, %v647, %v649
      %v660 = vsel %vm405, %v651, %v653
      %v661 = vsel %vm405, %v655, %v657
      %s662 = scalar_lea.vmem %s1, 64
      %v663 = vld [vmem:[%s662] sm:$0xff]
      %v664 = vld [vmem:[%s662 + $0x8] sm:$0xff]
      %v665 = vld [vmem:[%s662 + $0x10] sm:$0xff]
      %v666 = vld [vmem:[%s662 + $0x18] sm:$0xff]
      %v667 = vld [vmem:[%s662 + $0x20] sm:$0xff]
      %v668 = vld [vmem:[%s662 + $0x28] sm:$0xff]
      %v669 = vld [vmem:[%s662 + $0x30] sm:$0xff]
      %v670 = vld [vmem:[%s662 + $0x38] sm:$0xff]
      %v679 = vunpack.c.l.b16 %v663
      %v680 = vunpack.c.h.b16 %v663
      %v681 = vunpack.c.l.b16 %v664
      %v682 = vunpack.c.h.b16 %v664
      %v683 = vunpack.c.l.b16 %v665
      %v684 = vunpack.c.h.b16 %v665
      %v685 = vunpack.c.l.b16 %v666
      %v686 = vunpack.c.h.b16 %v666
      %v687 = vunpack.c.l.b16 %v667
      %v688 = vunpack.c.h.b16 %v667
      %v689 = vunpack.c.l.b16 %v668
      %v690 = vunpack.c.h.b16 %v668
      %v691 = vunpack.c.l.b16 %v669
      %v692 = vunpack.c.h.b16 %v669
      %v693 = vunpack.c.l.b16 %v670
      %v694 = vunpack.c.h.b16 %v670
      %v695 = vpack.c.b16 %v681, %v679
      %v696 = vpack.c.b16 %v682, %v680
      %v697 = vpack.c.b16 %v685, %v683
      %v698 = vpack.c.b16 %v686, %v684
      %v699 = vpack.c.b16 %v689, %v687
      %v700 = vpack.c.b16 %v690, %v688
      %v701 = vpack.c.b16 %v693, %v691
      %v702 = vpack.c.b16 %v694, %v692
      %707 = vrot.lane.b32.xlu0 %v357, 16
      %v708 = vpop.permute.xlu0 %707
      %709 = vrot.lane.b32.xlu0 %v358, 16
      %v710 = vpop.permute.xlu0 %709
      %711 = vrot.lane.b32.xlu0 %v359, 16
      %v712 = vpop.permute.xlu0 %711
      %713 = vrot.lane.b32.xlu0 %v360, 16
      %v714 = vpop.permute.xlu0 %713
      %715 = vrot.lane.b32.xlu0 %v361, 16
      %v716 = vpop.permute.xlu0 %715
      %717 = vrot.lane.b32.xlu0 %v362, 16
      %v718 = vpop.permute.xlu0 %717
      %719 = vrot.lane.b32.xlu0 %v363, 16
      %v720 = vpop.permute.xlu0 %719
      %721 = vrot.lane.b32.xlu0 %v364, 16
      %v722 = vpop.permute.xlu0 %721
      %723 = vrot.lane.b32.xlu0 %v365, 16
      %v724 = vpop.permute.xlu0 %723
      %725 = vrot.lane.b32.xlu0 %v366, 16
      %v726 = vpop.permute.xlu0 %725
      %727 = vrot.lane.b32.xlu0 %v367, 16
      %v728 = vpop.permute.xlu0 %727
      %729 = vrot.lane.b32.xlu0 %v368, 16
      %v730 = vpop.permute.xlu0 %729
      %731 = vrot.lane.b32.xlu0 %v643, 16
      %v732 = vpop.permute.xlu0 %731
      %733 = vrot.lane.b32.xlu0 %v658, 16
      %v734 = vpop.permute.xlu0 %733
      %735 = vrot.lane.b32.xlu0 %v645, 16
      %v736 = vpop.permute.xlu0 %735
      %737 = vrot.lane.b32.xlu0 %v647, 16
      %v738 = vpop.permute.xlu0 %737
      %739 = vrot.lane.b32.xlu0 %v659, 16
      %v740 = vpop.permute.xlu0 %739
      %741 = vrot.lane.b32.xlu0 %v649, 16
      %v742 = vpop.permute.xlu0 %741
      %743 = vrot.lane.b32.xlu0 %v651, 16
      %v744 = vpop.permute.xlu0 %743
      %745 = vrot.lane.b32.xlu0 %v660, 16
      %v746 = vpop.permute.xlu0 %745
      %747 = vrot.lane.b32.xlu0 %v653, 16
      %v748 = vpop.permute.xlu0 %747
      %749 = vrot.lane.b32.xlu0 %v655, 16
      %v750 = vpop.permute.xlu0 %749
      %751 = vrot.lane.b32.xlu0 %v661, 16
      %v752 = vpop.permute.xlu0 %751
      %753 = vrot.lane.b32.xlu0 %v657, 16
      %v754 = vpop.permute.xlu0 %753
      %755 = vrot.lane.b32.xlu0 %v479, 16
      %v756 = vpop.permute.xlu0 %755
      %757 = vrot.lane.b32.xlu0 %v503, 16
      %v758 = vpop.permute.xlu0 %757
      %759 = vrot.lane.b32.xlu0 %v504, 16
      %v760 = vpop.permute.xlu0 %759
      %761 = vrot.lane.b32.xlu0 %v485, 16
      %v762 = vpop.permute.xlu0 %761
      %763 = vrot.lane.b32.xlu0 %v505, 16
      %v764 = vpop.permute.xlu0 %763
      %765 = vrot.lane.b32.xlu0 %v506, 16
      %v766 = vpop.permute.xlu0 %765
      %767 = vrot.lane.b32.xlu0 %v491, 16
      %v768 = vpop.permute.xlu0 %767
      %769 = vrot.lane.b32.xlu0 %v507, 16
      %v770 = vpop.permute.xlu0 %769
      %771 = vrot.lane.b32.xlu0 %v508, 16
      %v772 = vpop.permute.xlu0 %771
      %773 = vrot.lane.b32.xlu0 %v497, 16
      %v774 = vpop.permute.xlu0 %773
      %775 = vrot.lane.b32.xlu0 %v509, 16
      %v776 = vpop.permute.xlu0 %775
      %777 = vrot.lane.b32.xlu0 %v510, 16
      %v778 = vpop.permute.xlu0 %777
      %vm779 = vcmask 130048
      %v780 = vsel %vm779, %v708, %v710
      %v781 = vsel %vm779, %v710, %v712
      %v782 = vsel %vm779, %v714, %v716
      %v783 = vsel %vm779, %v716, %v718
      %v784 = vsel %vm779, %v720, %v722
      %v785 = vsel %vm779, %v722, %v724
      %v786 = vsel %vm779, %v726, %v728
      %v787 = vsel %vm779, %v728, %v730
      %v788 = vsel %vm779, %v732, %v734
      %v789 = vsel %vm779, %v734, %v736
      %v790 = vsel %vm779, %v738, %v740
      %v791 = vsel %vm779, %v740, %v742
      %v792 = vsel %vm779, %v744, %v746
      %v793 = vsel %vm779, %v746, %v748
      %v794 = vsel %vm779, %v750, %v752
      %v795 = vsel %vm779, %v752, %v754
      %v796 = vsel %vm779, %v756, %v758
      %v797 = vsel %vm779, %v758, %v760
      %v798 = vsel %vm779, %v762, %v764
      %v799 = vsel %vm779, %v764, %v766
      %v800 = vsel %vm779, %v768, %v770
      %v801 = vsel %vm779, %v770, %v772
      %v802 = vsel %vm779, %v774, %v776
      %v803 = vsel %vm779, %v776, %v778
      %vm828 = vcmask 523264
      %v830 = vsel %vm828, %v696, 0
      %v833 = vsel %vm828, %v698, 0
      %v836 = vsel %vm828, %v700, 0
      %v839 = vsel %vm828, %v702, 0
      %841 = vmatpush.bf16.msra.mxu0 %v794
      %842 = vmatpush.bf16.msra.mxu0 %v792
      %843 = vmatpush.bf16.msra.mxu0 %v790
      %844 = vmatpush.bf16.msra.mxu0 %v788
      %845 = vmatpush.bf16.msra.mxu0 %v786
      %846 = vmatpush.bf16.msra.mxu0 %v784
      %847 = vmatpush.bf16.msra.mxu0 %v782
      %848 = vmatpush.bf16.msra.mxu0 %v780
      %849 = vmatmul.bf16.gmra.mxu0 %v695
      %v850 = vpop.f32.mrf.mxu0
      %v851 = vadd.f32 0.0, %v850
      %v852 = vpop.f32.mrf.mxu0
      %v853 = vadd.f32 0.0, %v852
      %854 = vmatmul.bf16.gmra.mxu0 %v697
      %v855 = vpop.f32.mrf.mxu0
      %v856 = vadd.f32 0.0, %v855
      %v857 = vpop.f32.mrf.mxu0
      %v858 = vadd.f32 0.0, %v857
      %859 = vmatmul.bf16.gmra.mxu0 %v699
      %v860 = vpop.f32.mrf.mxu0
      %v861 = vadd.f32 0.0, %v860
      %v862 = vpop.f32.mrf.mxu0
      %v863 = vadd.f32 0.0, %v862
      %864 = vmatmul.bf16.gmra.mxu0 %v701
      %v865 = vpop.f32.mrf.mxu0
      %v866 = vadd.f32 0.0, %v865
      %v867 = vpop.f32.mrf.mxu0
      %v868 = vadd.f32 0.0, %v867
      %869 = vdwg.mxu0
      %870 = vmatpush.bf16.msra.mxu0 0
      %871 = vmatpush.bf16.msra.mxu0 0
      %872 = vmatpush.bf16.msra.mxu0 0
      %873 = vmatpush.bf16.msra.mxu0 0
      %874 = vmatpush.bf16.msra.mxu0 %v802
      %875 = vmatpush.bf16.msra.mxu0 %v800
      %876 = vmatpush.bf16.msra.mxu0 %v798
      %877 = vmatpush.bf16.msra.mxu0 %v796
      %878 = vmatmul.bf16.gmra.mxu0 %v830
      %v879 = vpop.f32.mrf.mxu0
      %v880 = vadd.f32 %v851, %v879
      %v881 = vpop.f32.mrf.mxu0
      %v882 = vadd.f32 %v853, %v881
      %883 = vmatmul.bf16.gmra.mxu0 %v833
      %v884 = vpop.f32.mrf.mxu0
      %v885 = vadd.f32 %v856, %v884
      %v886 = vpop.f32.mrf.mxu0
      %v887 = vadd.f32 %v858, %v886
      %888 = vmatmul.bf16.gmra.mxu0 %v836
      %v889 = vpop.f32.mrf.mxu0
      %v890 = vadd.f32 %v861, %v889
      %v891 = vpop.f32.mrf.mxu0
      %v892 = vadd.f32 %v863, %v891
      %893 = vmatmul.bf16.gmra.mxu0 %v839
      %v894 = vpop.f32.mrf.mxu0
      %v895 = vadd.f32 %v866, %v894
      %v896 = vpop.f32.mrf.mxu0
      %v897 = vadd.f32 %v868, %v896
      %898 = vdwg.mxu0
      %899 = vmatpush.bf16.msra.mxu0 %v795
      %900 = vmatpush.bf16.msra.mxu0 %v793
      %901 = vmatpush.bf16.msra.mxu0 %v791
      %902 = vmatpush.bf16.msra.mxu0 %v789
      %903 = vmatpush.bf16.msra.mxu0 %v787
      %904 = vmatpush.bf16.msra.mxu0 %v785
      %905 = vmatpush.bf16.msra.mxu0 %v783
      %906 = vmatpush.bf16.msra.mxu0 %v781
      %907 = vmatmul.bf16.gmra.mxu0 %v695
      %v908 = vpop.f32.mrf.mxu0
      %v909 = vadd.f32 0.0, %v908
      %v910 = vpop.f32.mrf.mxu0
      %v911 = vadd.f32 0.0, %v910
      %912 = vmatmul.bf16.gmra.mxu0 %v697
      %v913 = vpop.f32.mrf.mxu0
      %v914 = vadd.f32 0.0, %v913
      %v915 = vpop.f32.mrf.mxu0
      %v916 = vadd.f32 0.0, %v915
      %917 = vmatmul.bf16.gmra.mxu0 %v699
      %v918 = vpop.f32.mrf.mxu0
      %v919 = vadd.f32 0.0, %v918
      %v920 = vpop.f32.mrf.mxu0
      %v921 = vadd.f32 0.0, %v920
      %922 = vmatmul.bf16.gmra.mxu0 %v701
      %v923 = vpop.f32.mrf.mxu0
      %v924 = vadd.f32 0.0, %v923
      %v925 = vpop.f32.mrf.mxu0
      %v926 = vadd.f32 0.0, %v925
      %927 = vdwg.mxu0
      %928 = vmatpush.bf16.msra.mxu0 0
      %929 = vmatpush.bf16.msra.mxu0 0
      %930 = vmatpush.bf16.msra.mxu0 0
      %931 = vmatpush.bf16.msra.mxu0 0
      %932 = vmatpush.bf16.msra.mxu0 %v803
      %933 = vmatpush.bf16.msra.mxu0 %v801
      %934 = vmatpush.bf16.msra.mxu0 %v799
      %935 = vmatpush.bf16.msra.mxu0 %v797
      %936 = vmatmul.bf16.gmra.mxu0 %v830
      %v937 = vpop.f32.mrf.mxu0
      %v938 = vadd.f32 %v909, %v937
      %v939 = vpop.f32.mrf.mxu0
      %v940 = vadd.f32 %v911, %v939
      %941 = vmatmul.bf16.gmra.mxu0 %v833
      %v942 = vpop.f32.mrf.mxu0
      %v943 = vadd.f32 %v914, %v942
      %v944 = vpop.f32.mrf.mxu0
      %v945 = vadd.f32 %v916, %v944
      %946 = vmatmul.bf16.gmra.mxu0 %v836
      %v947 = vpop.f32.mrf.mxu0
      %v948 = vadd.f32 %v919, %v947
      %v949 = vpop.f32.mrf.mxu0
      %v950 = vadd.f32 %v921, %v949
      %951 = vmatmul.bf16.gmra.mxu0 %v839
      %v952 = vpop.f32.mrf.mxu0
      %v953 = vadd.f32 %v924, %v952
      %v954 = vpop.f32.mrf.mxu0
      %v955 = vadd.f32 %v926, %v954
      %956 = vdwg.mxu0
      %v965 = vunpack.c.l.b16 %v594
      %v966 = vunpack.c.h.b16 %v594
      %v967 = vunpack.c.l.b16 %v595
      %v968 = vunpack.c.h.b16 %v595
      %v969 = vunpack.c.l.b16 %v596
      %v970 = vunpack.c.h.b16 %v596
      %v971 = vunpack.c.l.b16 %v597
      %v972 = vunpack.c.h.b16 %v597
      %v973 = vunpack.c.l.b16 %v598
      %v974 = vunpack.c.h.b16 %v598
      %v975 = vunpack.c.l.b16 %v599
      %v976 = vunpack.c.h.b16 %v599
      %v977 = vunpack.c.l.b16 %v600
      %v978 = vunpack.c.h.b16 %v600
      %v979 = vunpack.c.l.b16 %v601
      %v980 = vunpack.c.h.b16 %v601
      %v981 = vpack.c.b16 %v967, %v965
      %v982 = vpack.c.b16 %v968, %v966
      %v983 = vpack.c.b16 %v971, %v969
      %v984 = vpack.c.b16 %v972, %v970
      %v985 = vpack.c.b16 %v975, %v973
      %v986 = vpack.c.b16 %v976, %v974
      %v987 = vpack.c.b16 %v979, %v977
      %v988 = vpack.c.b16 %v980, %v978
      %1029 = vrot.lane.b32.xlu0 %v558, 17
      %v1030 = vpop.permute.xlu0 %1029
      %1031 = vrot.lane.b32.xlu0 %v559, 17
      %v1032 = vpop.permute.xlu0 %1031
      %1033 = vrot.lane.b32.xlu0 %v560, 17
      %v1034 = vpop.permute.xlu0 %1033
      %1035 = vrot.lane.b32.xlu0 %v561, 17
      %v1036 = vpop.permute.xlu0 %1035
      %1037 = vrot.lane.b32.xlu0 %v562, 17
      %v1038 = vpop.permute.xlu0 %1037
      %1039 = vrot.lane.b32.xlu0 %v563, 17
      %v1040 = vpop.permute.xlu0 %1039
      %1041 = vrot.lane.b32.xlu0 %v564, 17
      %v1042 = vpop.permute.xlu0 %1041
      %1043 = vrot.lane.b32.xlu0 %v565, 17
      %v1044 = vpop.permute.xlu0 %1043
      %1045 = vrot.lane.b32.xlu0 %v566, 17
      %v1046 = vpop.permute.xlu0 %1045
      %1047 = vrot.lane.b32.xlu0 %v567, 17
      %v1048 = vpop.permute.xlu0 %1047
      %1049 = vrot.lane.b32.xlu0 %v568, 17
      %v1050 = vpop.permute.xlu0 %1049
      %1051 = vrot.lane.b32.xlu0 %v569, 17
      %v1052 = vpop.permute.xlu0 %1051
      %1053 = vrot.lane.b32.xlu0 %v570, 17
      %v1054 = vpop.permute.xlu0 %1053
      %1055 = vrot.lane.b32.xlu0 %v571, 17
      %v1056 = vpop.permute.xlu0 %1055
      %1057 = vrot.lane.b32.xlu0 %v572, 17
      %v1058 = vpop.permute.xlu0 %1057
      %1059 = vrot.lane.b32.xlu0 %v573, 17
      %v1060 = vpop.permute.xlu0 %1059
      %1061 = vrot.lane.b32.xlu0 %v574, 17
      %v1062 = vpop.permute.xlu0 %1061
      %1063 = vrot.lane.b32.xlu0 %v575, 17
      %v1064 = vpop.permute.xlu0 %1063
      %1065 = vrot.lane.b32.xlu0 %v576, 17
      %v1066 = vpop.permute.xlu0 %1065
      %1067 = vrot.lane.b32.xlu0 %v577, 17
      %v1068 = vpop.permute.xlu0 %1067
      %1069 = vrot.lane.b32.xlu0 %v578, 17
      %v1070 = vpop.permute.xlu0 %1069
      %1071 = vrot.lane.b32.xlu0 %v579, 17
      %v1072 = vpop.permute.xlu0 %1071
      %1073 = vrot.lane.b32.xlu0 %v580, 17
      %v1074 = vpop.permute.xlu0 %1073
      %1075 = vrot.lane.b32.xlu0 %v581, 17
      %v1076 = vpop.permute.xlu0 %1075
      %1077 = vrot.lane.b32.xlu0 %v582, 17
      %v1078 = vpop.permute.xlu0 %1077
      %1079 = vrot.lane.b32.xlu0 %v583, 17
      %v1080 = vpop.permute.xlu0 %1079
      %1081 = vrot.lane.b32.xlu0 %v584, 17
      %v1082 = vpop.permute.xlu0 %1081
      %1083 = vrot.lane.b32.xlu0 %v585, 17
      %v1084 = vpop.permute.xlu0 %1083
      %1085 = vrot.lane.b32.xlu0 %v586, 17
      %v1086 = vpop.permute.xlu0 %1085
      %1087 = vrot.lane.b32.xlu0 %v587, 17
      %v1088 = vpop.permute.xlu0 %1087
      %1089 = vrot.lane.b32.xlu0 %v588, 17
      %v1090 = vpop.permute.xlu0 %1089
      %1091 = vrot.lane.b32.xlu0 %v589, 17
      %v1092 = vpop.permute.xlu0 %1091
      %1093 = vrot.lane.b32.xlu0 %v590, 17
      %v1094 = vpop.permute.xlu0 %1093
      %1095 = vrot.lane.b32.xlu0 %v591, 17
      %v1096 = vpop.permute.xlu0 %1095
      %1097 = vrot.lane.b32.xlu0 %v592, 17
      %v1098 = vpop.permute.xlu0 %1097
      %1099 = vrot.lane.b32.xlu0 %v593, 17
      %v1100 = vpop.permute.xlu0 %1099
      %vm1101 = vcmask 138240
      %v1102 = vsel %vm1101, %v1030, %v1032
      %v1103 = vsel %vm1101, %v1032, %v1034
      %v1104 = vsel %vm1101, %v1036, %v1038
      %v1105 = vsel %vm1101, %v1038, %v1040
      %v1106 = vsel %vm1101, %v1042, %v1044
      %v1107 = vsel %vm1101, %v1044, %v1046
      %v1108 = vsel %vm1101, %v1048, %v1050
      %v1109 = vsel %vm1101, %v1050, %v1052
      %v1110 = vsel %vm1101, %v1054, %v1056
      %v1111 = vsel %vm1101, %v1056, %v1058
      %v1112 = vsel %vm1101, %v1060, %v1062
      %v1113 = vsel %vm1101, %v1062, %v1064
      %v1114 = vsel %vm1101, %v1066, %v1068
      %v1115 = vsel %vm1101, %v1068, %v1070
      %v1116 = vsel %vm1101, %v1072, %v1074
      %v1117 = vsel %vm1101, %v1074, %v1076
      %v1118 = vsel %vm1101, %v1078, %v1080
      %v1119 = vsel %vm1101, %v1080, %v1082
      %v1120 = vsel %vm1101, %v1084, %v1086
      %v1121 = vsel %vm1101, %v1086, %v1088
      %v1122 = vsel %vm1101, %v1090, %v1092
      %v1123 = vsel %vm1101, %v1092, %v1094
      %v1124 = vsel %vm1101, %v1096, %v1098
      %v1125 = vsel %vm1101, %v1098, %v1100
      %v1151 = vsel %vm828, %v982, 0
      %v1154 = vsel %vm828, %v984, 0
      %v1157 = vsel %vm828, %v986, 0
      %v1160 = vsel %vm828, %v988, 0
      %1162 = vmatpush.bf16.msra.mxu0 %v1116
      %1163 = vmatpush.bf16.msra.mxu0 %v1114
      %1164 = vmatpush.bf16.msra.mxu0 %v1112
      %1165 = vmatpush.bf16.msra.mxu0 %v1110
      %1166 = vmatpush.bf16.msra.mxu0 %v1108
      %1167 = vmatpush.bf16.msra.mxu0 %v1106
      %1168 = vmatpush.bf16.msra.mxu0 %v1104
      %1169 = vmatpush.bf16.msra.mxu0 %v1102
      %1170 = vmatmul.bf16.gmra.mxu0 %v981
      %v1171 = vpop.f32.mrf.mxu0
      %v1172 = vadd.f32 %v880, %v1171
      %v1173 = vpop.f32.mrf.mxu0
      %v1174 = vadd.f32 %v882, %v1173
      %1175 = vmatmul.bf16.gmra.mxu0 %v983
      %v1176 = vpop.f32.mrf.mxu0
      %v1177 = vadd.f32 %v885, %v1176
      %v1178 = vpop.f32.mrf.mxu0
      %v1179 = vadd.f32 %v887, %v1178
      %1180 = vmatmul.bf16.gmra.mxu0 %v985
      %v1181 = vpop.f32.mrf.mxu0
      %v1182 = vadd.f32 %v890, %v1181
      %v1183 = vpop.f32.mrf.mxu0
      %v1184 = vadd.f32 %v892, %v1183
      %1185 = vmatmul.bf16.gmra.mxu0 %v987
      %v1186 = vpop.f32.mrf.mxu0
      %v1187 = vadd.f32 %v895, %v1186
      %v1188 = vpop.f32.mrf.mxu0
      %v1189 = vadd.f32 %v897, %v1188
      %1190 = vdwg.mxu0
      %1191 = vmatpush.bf16.msra.mxu0 0
      %1192 = vmatpush.bf16.msra.mxu0 0
      %1193 = vmatpush.bf16.msra.mxu0 0
      %1194 = vmatpush.bf16.msra.mxu0 0
      %1195 = vmatpush.bf16.msra.mxu0 %v1124
      %1196 = vmatpush.bf16.msra.mxu0 %v1122
      %1197 = vmatpush.bf16.msra.mxu0 %v1120
      %1198 = vmatpush.bf16.msra.mxu0 %v1118
      %1199 = vmatmul.bf16.gmra.mxu0 %v1151
      %v1200 = vpop.f32.mrf.mxu0
      %v1201 = vadd.f32 %v1172, %v1200
      %v1202 = vpop.f32.mrf.mxu0
      %v1203 = vadd.f32 %v1174, %v1202
      %1204 = vmatmul.bf16.gmra.mxu0 %v1154
      %v1205 = vpop.f32.mrf.mxu0
      %v1206 = vadd.f32 %v1177, %v1205
      %v1207 = vpop.f32.mrf.mxu0
      %v1208 = vadd.f32 %v1179, %v1207
      %1209 = vmatmul.bf16.gmra.mxu0 %v1157
      %v1210 = vpop.f32.mrf.mxu0
      %v1211 = vadd.f32 %v1182, %v1210
      %v1212 = vpop.f32.mrf.mxu0
      %v1213 = vadd.f32 %v1184, %v1212
      %1214 = vmatmul.bf16.gmra.mxu0 %v1160
      %v1215 = vpop.f32.mrf.mxu0
      %v1216 = vadd.f32 %v1187, %v1215
      %v1217 = vpop.f32.mrf.mxu0
      %v1218 = vadd.f32 %v1189, %v1217
      %1219 = vdwg.mxu0
      %1220 = vmatpush.bf16.msra.mxu0 %v1117
      %1221 = vmatpush.bf16.msra.mxu0 %v1115
      %1222 = vmatpush.bf16.msra.mxu0 %v1113
      %1223 = vmatpush.bf16.msra.mxu0 %v1111
      %1224 = vmatpush.bf16.msra.mxu0 %v1109
      %1225 = vmatpush.bf16.msra.mxu0 %v1107
      %1226 = vmatpush.bf16.msra.mxu0 %v1105
      %1227 = vmatpush.bf16.msra.mxu0 %v1103
      %1228 = vmatmul.bf16.gmra.mxu0 %v981
      %v1229 = vpop.f32.mrf.mxu0
      %v1230 = vadd.f32 %v938, %v1229
      %v1231 = vpop.f32.mrf.mxu0
      %v1232 = vadd.f32 %v940, %v1231
      %1233 = vmatmul.bf16.gmra.mxu0 %v983
      %v1234 = vpop.f32.mrf.mxu0
      %v1235 = vadd.f32 %v943, %v1234
      %v1236 = vpop.f32.mrf.mxu0
      %v1237 = vadd.f32 %v945, %v1236
      %1238 = vmatmul.bf16.gmra.mxu0 %v985
      %v1239 = vpop.f32.mrf.mxu0
      %v1240 = vadd.f32 %v948, %v1239
      %v1241 = vpop.f32.mrf.mxu0
      %v1242 = vadd.f32 %v950, %v1241
      %1243 = vmatmul.bf16.gmra.mxu0 %v987
      %v1244 = vpop.f32.mrf.mxu0
      %v1245 = vadd.f32 %v953, %v1244
      %v1246 = vpop.f32.mrf.mxu0
      %v1247 = vadd.f32 %v955, %v1246
      %1248 = vdwg.mxu0
      %1249 = vmatpush.bf16.msra.mxu0 0
      %1250 = vmatpush.bf16.msra.mxu0 0
      %1251 = vmatpush.bf16.msra.mxu0 0
      %1252 = vmatpush.bf16.msra.mxu0 0
      %1253 = vmatpush.bf16.msra.mxu0 %v1125
      %1254 = vmatpush.bf16.msra.mxu0 %v1123
      %1255 = vmatpush.bf16.msra.mxu0 %v1121
      %1256 = vmatpush.bf16.msra.mxu0 %v1119
      %1257 = vmatmul.bf16.gmra.mxu0 %v1151
      %v1258 = vpop.f32.mrf.mxu0
      %v1259 = vadd.f32 %v1230, %v1258
      %v1260 = vpop.f32.mrf.mxu0
      %v1261 = vadd.f32 %v1232, %v1260
      %1262 = vmatmul.bf16.gmra.mxu0 %v1154
      %v1263 = vpop.f32.mrf.mxu0
      %v1264 = vadd.f32 %v1235, %v1263
      %v1265 = vpop.f32.mrf.mxu0
      %v1266 = vadd.f32 %v1237, %v1265
      %1267 = vmatmul.bf16.gmra.mxu0 %v1157
      %v1268 = vpop.f32.mrf.mxu0
      %v1269 = vadd.f32 %v1240, %v1268
      %v1270 = vpop.f32.mrf.mxu0
      %v1271 = vadd.f32 %v1242, %v1270
      %1272 = vmatmul.bf16.gmra.mxu0 %v1160
      %v1273 = vpop.f32.mrf.mxu0
      %v1274 = vadd.f32 %v1245, %v1273
      %v1275 = vpop.f32.mrf.mxu0
      %v1276 = vadd.f32 %v1247, %v1275
      %1277 = vdwg.mxu0
      %1278 = vrot.lane.b32.xlu0 %v466, 112
      %v1279 = vpop.permute.xlu0 %1278
      %1280 = vrot.lane.b32.xlu0 %v467, 112
      %v1281 = vpop.permute.xlu0 %1280
      %1282 = vrot.lane.b32.xlu0 %v468, 112
      %v1283 = vpop.permute.xlu0 %1282
      %1284 = vrot.lane.b32.xlu0 %v469, 112
      %v1285 = vpop.permute.xlu0 %1284
      %1286 = vrot.lane.b32.xlu0 %v470, 112
      %v1287 = vpop.permute.xlu0 %1286
      %1288 = vrot.lane.b32.xlu0 %v471, 112
      %v1289 = vpop.permute.xlu0 %1288
      %1290 = vrot.lane.b32.xlu0 %v472, 112
      %v1291 = vpop.permute.xlu0 %1290
      %1292 = vrot.lane.b32.xlu0 %v473, 112
      %v1293 = vpop.permute.xlu0 %1292
      %1294 = vrot.lane.b32.xlu0 %v474, 112
      %v1295 = vpop.permute.xlu0 %1294
      %1296 = vrot.lane.b32.xlu0 %v475, 112
      %v1297 = vpop.permute.xlu0 %1296
      %1298 = vrot.lane.b32.xlu0 %v476, 112
      %v1299 = vpop.permute.xlu0 %1298
      %1300 = vrot.lane.b32.xlu0 %v477, 112
      %v1301 = vpop.permute.xlu0 %1300
      %v1302 = vsel %vm405, %v1279, %v1281
      %v1303 = vsel %vm405, %v1281, %v1283
      %v1304 = vsel %vm405, %v1285, %v1287
      %v1305 = vsel %vm405, %v1287, %v1289
      %v1306 = vsel %vm405, %v1291, %v1293
      %v1307 = vsel %vm405, %v1293, %v1295
      %v1308 = vsel %vm405, %v1297, %v1299
      %v1309 = vsel %vm405, %v1299, %v1301
      %v1322 = vsel %vm235, 1, 0
      %v1323 = vsel %vm236, 1, 0
      %vm1324 = vcmp.eq.s32.totalorder %v1322, 1
      %vm1325 = vcmp.eq.s32.totalorder %v1323, 1
      %vm1326 = vmpackc.low %vm1325, %vm1324
      %v1327 = vsel %vm1326, 65537, 0
      %v1328 = vperm.slane %v1327, 0
      %v1329 = vperm.slane %v1327, 4
      %1330 = vrot.lane.b32.xlu0 %v1328, 113
      %v1331 = vpop.permute.xlu0 %1330
      %1332 = vrot.lane.b32.xlu0 %v1329, 113
      %v1333 = vpop.permute.xlu0 %1332
      %vm1334 = vcmask 924672
      %v1335 = vsel %vm1334, %v1331, %v1333
      %v1336 = vunpack.c.l.b16 %v1331
      %v1337 = vunpack.c.h.b16 %v1331
      %v1338 = vunpack.c.l.b16 0
      %v1339 = vunpack.c.h.b16 0
      %vm1340 = vcmp.ne.s32.totalorder %v1336, %v1338
      %vm1341 = vcmp.ne.s32.totalorder %v1337, %v1339
      %vm1342 = vmpackc.low %vm1341, %vm1340
      %v1343 = vunpack.c.l.b16 %v1335
      %v1344 = vunpack.c.h.b16 %v1335
      %v1345 = vunpack.c.l.b16 0
      %v1346 = vunpack.c.h.b16 0
      %vm1347 = vcmp.ne.s32.totalorder %v1343, %v1345
      %vm1348 = vcmp.ne.s32.totalorder %v1344, %v1346
      %vm1349 = vmpackc.low %vm1348, %vm1347
      %v1350 = vunpack.c.l.b16 %v1333
      %v1351 = vunpack.c.h.b16 %v1333
      %v1352 = vunpack.c.l.b16 0
      %v1353 = vunpack.c.h.b16 0
      %vm1354 = vcmp.ne.s32.totalorder %v1350, %v1352
      %vm1355 = vcmp.ne.s32.totalorder %v1351, %v1353
      %vm1356 = vmpackc.low %vm1355, %vm1354
      %v1357 = vsel %vm1342, %v357, 0
      %v1358 = vsel %vm1349, %v358, 0
      %v1359 = vsel %vm1356, %v359, 0
      %v1360 = vsel %vm1342, %v360, 0
      %v1361 = vsel %vm1349, %v361, 0
      %v1362 = vsel %vm1356, %v362, 0
      %v1363 = vsel %vm1342, %v363, 0
      %v1364 = vsel %vm1349, %v364, 0
      %v1365 = vsel %vm1356, %v365, 0
      %v1366 = vsel %vm1342, %v366, 0
      %v1367 = vsel %vm1349, %v367, 0
      %v1368 = vsel %vm1356, %v368, 0
      %v1369 = vsel %vm1342, %v1279, 0
      %v1370 = vsel %vm1349, %v1302, 0
      %v1371 = vsel %vm1356, %v1303, 0
      %v1372 = vsel %vm1342, %v1285, 0
      %v1373 = vsel %vm1349, %v1304, 0
      %v1374 = vsel %vm1356, %v1305, 0
      %v1375 = vsel %vm1342, %v1291, 0
      %v1376 = vsel %vm1349, %v1306, 0
      %v1377 = vsel %vm1356, %v1307, 0
      %v1378 = vsel %vm1342, %v1297, 0
      %v1379 = vsel %vm1349, %v1308, 0
      %v1380 = vsel %vm1356, %v1309, 0
      %v1381 = vsel %vm1342, %v479, 0
      %v1382 = vsel %vm1349, %v503, 0
      %v1383 = vsel %vm1356, %v504, 0
      %v1384 = vsel %vm1342, %v485, 0
      %v1385 = vsel %vm1349, %v505, 0
      %v1386 = vsel %vm1356, %v506, 0
      %v1387 = vsel %vm1342, %v491, 0
      %v1388 = vsel %vm1349, %v507, 0
      %v1389 = vsel %vm1356, %v508, 0
      %v1390 = vsel %vm1342, %v497, 0
      %v1391 = vsel %vm1349, %v509, 0
      %v1392 = vsel %vm1356, %v510, 0
      %s1393 = scalar_lea.vmem %s1, 128
      %v1394 = vld [vmem:[%s1393] sm:$0xff]
      %v1395 = vld [vmem:[%s1393 + $0x8] sm:$0xff]
      %v1396 = vld [vmem:[%s1393 + $0x10] sm:$0xff]
      %v1397 = vld [vmem:[%s1393 + $0x18] sm:$0xff]
      %v1398 = vld [vmem:[%s1393 + $0x20] sm:$0xff]
      %v1399 = vld [vmem:[%s1393 + $0x28] sm:$0xff]
      %v1400 = vld [vmem:[%s1393 + $0x30] sm:$0xff]
      %v1401 = vld [vmem:[%s1393 + $0x38] sm:$0xff]
      %v1410 = vunpack.c.l.b16 %v1394
      %v1411 = vunpack.c.h.b16 %v1394
      %v1412 = vunpack.c.l.b16 %v1395
      %v1413 = vunpack.c.h.b16 %v1395
      %v1414 = vunpack.c.l.b16 %v1396
      %v1415 = vunpack.c.h.b16 %v1396
      %v1416 = vunpack.c.l.b16 %v1397
      %v1417 = vunpack.c.h.b16 %v1397
      %v1418 = vunpack.c.l.b16 %v1398
      %v1419 = vunpack.c.h.b16 %v1398
      %v1420 = vunpack.c.l.b16 %v1399
      %v1421 = vunpack.c.h.b16 %v1399
      %v1422 = vunpack.c.l.b16 %v1400
      %v1423 = vunpack.c.h.b16 %v1400
      %v1424 = vunpack.c.l.b16 %v1401
      %v1425 = vunpack.c.h.b16 %v1401
      %v1426 = vpack.c.b16 %v1412, %v1410
      %v1427 = vpack.c.b16 %v1413, %v1411
      %v1428 = vpack.c.b16 %v1416, %v1414
      %v1429 = vpack.c.b16 %v1417, %v1415
      %v1430 = vpack.c.b16 %v1420, %v1418
      %v1431 = vpack.c.b16 %v1421, %v1419
      %v1432 = vpack.c.b16 %v1424, %v1422
      %v1433 = vpack.c.b16 %v1425, %v1423
      %1474 = vrot.lane.b32.xlu0 %v1357, 15
      %v1475 = vpop.permute.xlu0 %1474
      %1476 = vrot.lane.b32.xlu0 %v1358, 15
      %v1477 = vpop.permute.xlu0 %1476
      %1478 = vrot.lane.b32.xlu0 %v1359, 15
      %v1479 = vpop.permute.xlu0 %1478
      %1480 = vrot.lane.b32.xlu0 %v1360, 15
      %v1481 = vpop.permute.xlu0 %1480
      %1482 = vrot.lane.b32.xlu0 %v1361, 15
      %v1483 = vpop.permute.xlu0 %1482
      %1484 = vrot.lane.b32.xlu0 %v1362, 15
      %v1485 = vpop.permute.xlu0 %1484
      %1486 = vrot.lane.b32.xlu0 %v1363, 15
      %v1487 = vpop.permute.xlu0 %1486
      %1488 = vrot.lane.b32.xlu0 %v1364, 15
      %v1489 = vpop.permute.xlu0 %1488
      %1490 = vrot.lane.b32.xlu0 %v1365, 15
      %v1491 = vpop.permute.xlu0 %1490
      %1492 = vrot.lane.b32.xlu0 %v1366, 15
      %v1493 = vpop.permute.xlu0 %1492
      %1494 = vrot.lane.b32.xlu0 %v1367, 15
      %v1495 = vpop.permute.xlu0 %1494
      %1496 = vrot.lane.b32.xlu0 %v1368, 15
      %v1497 = vpop.permute.xlu0 %1496
      %1498 = vrot.lane.b32.xlu0 %v1369, 15
      %v1499 = vpop.permute.xlu0 %1498
      %1500 = vrot.lane.b32.xlu0 %v1370, 15
      %v1501 = vpop.permute.xlu0 %1500
      %1502 = vrot.lane.b32.xlu0 %v1371, 15
      %v1503 = vpop.permute.xlu0 %1502
      %1504 = vrot.lane.b32.xlu0 %v1372, 15
      %v1505 = vpop.permute.xlu0 %1504
      %1506 = vrot.lane.b32.xlu0 %v1373, 15
      %v1507 = vpop.permute.xlu0 %1506
      %1508 = vrot.lane.b32.xlu0 %v1374, 15
      %v1509 = vpop.permute.xlu0 %1508
      %1510 = vrot.lane.b32.xlu0 %v1375, 15
      %v1511 = vpop.permute.xlu0 %1510
      %1512 = vrot.lane.b32.xlu0 %v1376, 15
      %v1513 = vpop.permute.xlu0 %1512
      %1514 = vrot.lane.b32.xlu0 %v1377, 15
      %v1515 = vpop.permute.xlu0 %1514
      %1516 = vrot.lane.b32.xlu0 %v1378, 15
      %v1517 = vpop.permute.xlu0 %1516
      %1518 = vrot.lane.b32.xlu0 %v1379, 15
      %v1519 = vpop.permute.xlu0 %1518
      %1520 = vrot.lane.b32.xlu0 %v1380, 15
      %v1521 = vpop.permute.xlu0 %1520
      %1522 = vrot.lane.b32.xlu0 %v1381, 15
      %v1523 = vpop.permute.xlu0 %1522
      %1524 = vrot.lane.b32.xlu0 %v1382, 15
      %v1525 = vpop.permute.xlu0 %1524
      %1526 = vrot.lane.b32.xlu0 %v1383, 15
      %v1527 = vpop.permute.xlu0 %1526
      %1528 = vrot.lane.b32.xlu0 %v1384, 15
      %v1529 = vpop.permute.xlu0 %1528
      %1530 = vrot.lane.b32.xlu0 %v1385, 15
      %v1531 = vpop.permute.xlu0 %1530
      %1532 = vrot.lane.b32.xlu0 %v1386, 15
      %v1533 = vpop.permute.xlu0 %1532
      %1534 = vrot.lane.b32.xlu0 %v1387, 15
      %v1535 = vpop.permute.xlu0 %1534
      %1536 = vrot.lane.b32.xlu0 %v1388, 15
      %v1537 = vpop.permute.xlu0 %1536
      %1538 = vrot.lane.b32.xlu0 %v1389, 15
      %v1539 = vpop.permute.xlu0 %1538
      %1540 = vrot.lane.b32.xlu0 %v1390, 15
      %v1541 = vpop.permute.xlu0 %1540
      %1542 = vrot.lane.b32.xlu0 %v1391, 15
      %v1543 = vpop.permute.xlu0 %1542
      %1544 = vrot.lane.b32.xlu0 %v1392, 15
      %v1545 = vpop.permute.xlu0 %1544
      %vm1546 = vcmask 121856
      %v1547 = vsel %vm1546, %v1475, %v1477
      %v1548 = vsel %vm1546, %v1477, %v1479
      %v1549 = vsel %vm1546, %v1481, %v1483
      %v1550 = vsel %vm1546, %v1483, %v1485
      %v1551 = vsel %vm1546, %v1487, %v1489
      %v1552 = vsel %vm1546, %v1489, %v1491
      %v1553 = vsel %vm1546, %v1493, %v1495
      %v1554 = vsel %vm1546, %v1495, %v1497
      %v1555 = vsel %vm1546, %v1499, %v1501
      %v1556 = vsel %vm1546, %v1501, %v1503
      %v1557 = vsel %vm1546, %v1505, %v1507
      %v1558 = vsel %vm1546, %v1507, %v1509
      %v1559 = vsel %vm1546, %v1511, %v1513
      %v1560 = vsel %vm1546, %v1513, %v1515
      %v1561 = vsel %vm1546, %v1517, %v1519
      %v1562 = vsel %vm1546, %v1519, %v1521
      %v1563 = vsel %vm1546, %v1523, %v1525
      %v1564 = vsel %vm1546, %v1525, %v1527
      %v1565 = vsel %vm1546, %v1529, %v1531
      %v1566 = vsel %vm1546, %v1531, %v1533
      %v1567 = vsel %vm1546, %v1535, %v1537
      %v1568 = vsel %vm1546, %v1537, %v1539
      %v1569 = vsel %vm1546, %v1541, %v1543
      %v1570 = vsel %vm1546, %v1543, %v1545
      %v1596 = vsel %vm828, %v1427, 0
      %v1599 = vsel %vm828, %v1429, 0
      %v1602 = vsel %vm828, %v1431, 0
      %v1605 = vsel %vm828, %v1433, 0
      %1607 = vmatpush.bf16.msra.mxu0 %v1561
      %1608 = vmatpush.bf16.msra.mxu0 %v1559
      %1609 = vmatpush.bf16.msra.mxu0 %v1557
      %1610 = vmatpush.bf16.msra.mxu0 %v1555
      %1611 = vmatpush.bf16.msra.mxu0 %v1553
      %1612 = vmatpush.bf16.msra.mxu0 %v1551
      %1613 = vmatpush.bf16.msra.mxu0 %v1549
      %1614 = vmatpush.bf16.msra.mxu0 %v1547
      %1615 = vmatmul.bf16.gmra.mxu0 %v1426
      %v1616 = vpop.f32.mrf.mxu0
      %v1617 = vadd.f32 0.0, %v1616
      %v1618 = vpop.f32.mrf.mxu0
      %v1619 = vadd.f32 0.0, %v1618
      %1620 = vmatmul.bf16.gmra.mxu0 %v1428
      %v1621 = vpop.f32.mrf.mxu0
      %v1622 = vadd.f32 0.0, %v1621
      %v1623 = vpop.f32.mrf.mxu0
      %v1624 = vadd.f32 0.0, %v1623
      %1625 = vmatmul.bf16.gmra.mxu0 %v1430
      %v1626 = vpop.f32.mrf.mxu0
      %v1627 = vadd.f32 0.0, %v1626
      %v1628 = vpop.f32.mrf.mxu0
      %v1629 = vadd.f32 0.0, %v1628
      %1630 = vmatmul.bf16.gmra.mxu0 %v1432
      %v1631 = vpop.f32.mrf.mxu0
      %v1632 = vadd.f32 0.0, %v1631
      %v1633 = vpop.f32.mrf.mxu0
      %v1634 = vadd.f32 0.0, %v1633
      %1635 = vdwg.mxu0
      %1636 = vmatpush.bf16.msra.mxu0 0
      %1637 = vmatpush.bf16.msra.mxu0 0
      %1638 = vmatpush.bf16.msra.mxu0 0
      %1639 = vmatpush.bf16.msra.mxu0 0
      %1640 = vmatpush.bf16.msra.mxu0 %v1569
      %1641 = vmatpush.bf16.msra.mxu0 %v1567
      %1642 = vmatpush.bf16.msra.mxu0 %v1565
      %1643 = vmatpush.bf16.msra.mxu0 %v1563
      %1644 = vmatmul.bf16.gmra.mxu0 %v1596
      %v1645 = vpop.f32.mrf.mxu0
      %v1646 = vadd.f32 %v1617, %v1645
      %v1647 = vpop.f32.mrf.mxu0
      %v1648 = vadd.f32 %v1619, %v1647
      %1649 = vmatmul.bf16.gmra.mxu0 %v1599
      %v1650 = vpop.f32.mrf.mxu0
      %v1651 = vadd.f32 %v1622, %v1650
      %v1652 = vpop.f32.mrf.mxu0
      %v1653 = vadd.f32 %v1624, %v1652
      %1654 = vmatmul.bf16.gmra.mxu0 %v1602
      %v1655 = vpop.f32.mrf.mxu0
      %v1656 = vadd.f32 %v1627, %v1655
      %v1657 = vpop.f32.mrf.mxu0
      %v1658 = vadd.f32 %v1629, %v1657
      %1659 = vmatmul.bf16.gmra.mxu0 %v1605
      %v1660 = vpop.f32.mrf.mxu0
      %v1661 = vadd.f32 %v1632, %v1660
      %v1662 = vpop.f32.mrf.mxu0
      %v1663 = vadd.f32 %v1634, %v1662
      %1664 = vdwg.mxu0
      %1665 = vmatpush.bf16.msra.mxu0 %v1562
      %1666 = vmatpush.bf16.msra.mxu0 %v1560
      %1667 = vmatpush.bf16.msra.mxu0 %v1558
      %1668 = vmatpush.bf16.msra.mxu0 %v1556
      %1669 = vmatpush.bf16.msra.mxu0 %v1554
      %1670 = vmatpush.bf16.msra.mxu0 %v1552
      %1671 = vmatpush.bf16.msra.mxu0 %v1550
      %1672 = vmatpush.bf16.msra.mxu0 %v1548
      %1673 = vmatmul.bf16.gmra.mxu0 %v1426
      %v1674 = vpop.f32.mrf.mxu0
      %v1675 = vadd.f32 0.0, %v1674
      %v1676 = vpop.f32.mrf.mxu0
      %v1677 = vadd.f32 0.0, %v1676
      %1678 = vmatmul.bf16.gmra.mxu0 %v1428
      %v1679 = vpop.f32.mrf.mxu0
      %v1680 = vadd.f32 0.0, %v1679
      %v1681 = vpop.f32.mrf.mxu0
      %v1682 = vadd.f32 0.0, %v1681
      %1683 = vmatmul.bf16.gmra.mxu0 %v1430
      %v1684 = vpop.f32.mrf.mxu0
      %v1685 = vadd.f32 0.0, %v1684
      %v1686 = vpop.f32.mrf.mxu0
      %v1687 = vadd.f32 0.0, %v1686
      %1688 = vmatmul.bf16.gmra.mxu0 %v1432
      %v1689 = vpop.f32.mrf.mxu0
      %v1690 = vadd.f32 0.0, %v1689
      %v1691 = vpop.f32.mrf.mxu0
      %v1692 = vadd.f32 0.0, %v1691
      %1693 = vdwg.mxu0
      %1694 = vmatpush.bf16.msra.mxu0 0
      %1695 = vmatpush.bf16.msra.mxu0 0
      %1696 = vmatpush.bf16.msra.mxu0 0
      %1697 = vmatpush.bf16.msra.mxu0 0
      %1698 = vmatpush.bf16.msra.mxu0 %v1570
      %1699 = vmatpush.bf16.msra.mxu0 %v1568
      %1700 = vmatpush.bf16.msra.mxu0 %v1566
      %1701 = vmatpush.bf16.msra.mxu0 %v1564
      %1702 = vmatmul.bf16.gmra.mxu0 %v1596
      %v1703 = vpop.f32.mrf.mxu0
      %v1704 = vadd.f32 %v1675, %v1703
      %v1705 = vpop.f32.mrf.mxu0
      %v1706 = vadd.f32 %v1677, %v1705
      %1707 = vmatmul.bf16.gmra.mxu0 %v1599
      %v1708 = vpop.f32.mrf.mxu0
      %v1709 = vadd.f32 %v1680, %v1708
      %v1710 = vpop.f32.mrf.mxu0
      %v1711 = vadd.f32 %v1682, %v1710
      %1712 = vmatmul.bf16.gmra.mxu0 %v1602
      %v1713 = vpop.f32.mrf.mxu0
      %v1714 = vadd.f32 %v1685, %v1713
      %v1715 = vpop.f32.mrf.mxu0
      %v1716 = vadd.f32 %v1687, %v1715
      %1717 = vmatmul.bf16.gmra.mxu0 %v1605
      %v1718 = vpop.f32.mrf.mxu0
      %v1719 = vadd.f32 %v1690, %v1718
      %v1720 = vpop.f32.mrf.mxu0
      %v1721 = vadd.f32 %v1692, %v1720
      %1722 = vdwg.mxu0
      %v1723 = vadd.f32 %v1201, %v1646
      %v1724 = vadd.f32 %v1259, %v1704
      %v1725 = vadd.f32 %v1203, %v1648
      %v1726 = vadd.f32 %v1261, %v1706
      %v1727 = vadd.f32 %v1206, %v1651
      %v1728 = vadd.f32 %v1264, %v1709
      %v1729 = vadd.f32 %v1208, %v1653
      %v1730 = vadd.f32 %v1266, %v1711
      %v1731 = vadd.f32 %v1211, %v1656
      %v1732 = vadd.f32 %v1269, %v1714
      %v1733 = vadd.f32 %v1213, %v1658
      %v1734 = vadd.f32 %v1271, %v1716
      %v1735 = vadd.f32 %v1216, %v1661
      %v1736 = vadd.f32 %v1274, %v1719
      %v1737 = vadd.f32 %v1218, %v1663
      %v1738 = vadd.f32 %v1276, %v1721
      %v1739 = vld [vmem:[%s2] sm:$0xff]
      %v1740 = vld [vmem:[%s2 + $0x8] sm:$0xff]
      %v1741 = vld [vmem:[%s2 + $0x10] sm:$0xff]
      %v1742 = vld [vmem:[%s2 + $0x18] sm:$0xff]
      %v1743 = vld [vmem:[%s2 + $0x20] sm:$0xff]
      %v1744 = vld [vmem:[%s2 + $0x28] sm:$0xff]
      %v1745 = vld [vmem:[%s2 + $0x30] sm:$0xff]
      %v1746 = vld [vmem:[%s2 + $0x38] sm:$0xff]
      %1748 = vset.pattern.permute.xlu0 0
      %1749 = vperm.xlu0 %1748, %v1739
      %v1750 = vpop.permute.xlu0 %1749
      %1753 = vset.pattern.permute.xlu0 0
      %1754 = vperm.xlu0 %1753, %v1740
      %v1755 = vpop.permute.xlu0 %1754
      %1758 = vset.pattern.permute.xlu0 0
      %1759 = vperm.xlu0 %1758, %v1741
      %v1760 = vpop.permute.xlu0 %1759
      %1763 = vset.pattern.permute.xlu0 0
      %1764 = vperm.xlu0 %1763, %v1742
      %v1765 = vpop.permute.xlu0 %1764
      %1768 = vset.pattern.permute.xlu0 0
      %1769 = vperm.xlu0 %1768, %v1743
      %v1770 = vpop.permute.xlu0 %1769
      %1773 = vset.pattern.permute.xlu0 0
      %1774 = vperm.xlu0 %1773, %v1744
      %v1775 = vpop.permute.xlu0 %1774
      %1778 = vset.pattern.permute.xlu0 0
      %1779 = vperm.xlu0 %1778, %v1745
      %v1780 = vpop.permute.xlu0 %1779
      %1783 = vset.pattern.permute.xlu0 0
      %1784 = vperm.xlu0 %1783, %v1746
      %v1785 = vpop.permute.xlu0 %1784
      %v1787 = vadd.f32 %v1723, %v1750
      %v1788 = vadd.f32 %v1724, %v1750
      %v1789 = vadd.f32 %v1725, %v1755
      %v1790 = vadd.f32 %v1726, %v1755
      %v1791 = vadd.f32 %v1727, %v1760
      %v1792 = vadd.f32 %v1728, %v1760
      %v1793 = vadd.f32 %v1729, %v1765
      %v1794 = vadd.f32 %v1730, %v1765
      %v1795 = vadd.f32 %v1731, %v1770
      %v1796 = vadd.f32 %v1732, %v1770
      %v1797 = vadd.f32 %v1733, %v1775
      %v1798 = vadd.f32 %v1734, %v1775
      %v1799 = vadd.f32 %v1735, %v1780
      %v1800 = vadd.f32 %v1736, %v1780
      %v1801 = vadd.f32 %v1737, %v1785
      %v1802 = vadd.f32 %v1738, %v1785
      %v1803 = vmax.f32 %v1787, 0.0
      %v1804 = vmax.f32 %v1788, 0.0
      %v1805 = vmax.f32 %v1789, 0.0
      %v1806 = vmax.f32 %v1790, 0.0
      %v1807 = vmax.f32 %v1791, 0.0
      %v1808 = vmax.f32 %v1792, 0.0
      %v1809 = vmax.f32 %v1793, 0.0
      %v1810 = vmax.f32 %v1794, 0.0
      %v1811 = vmax.f32 %v1795, 0.0
      %v1812 = vmax.f32 %v1796, 0.0
      %v1813 = vmax.f32 %v1797, 0.0
      %v1814 = vmax.f32 %v1798, 0.0
      %v1815 = vmax.f32 %v1799, 0.0
      %v1816 = vmax.f32 %v1800, 0.0
      %v1817 = vmax.f32 %v1801, 0.0
      %v1818 = vmax.f32 %v1802, 0.0
      %v1819 = vpack.c.bf16 %v1804, %v1803
      %v1820 = vpack.c.bf16 %v1806, %v1805
      %v1821 = vpack.c.bf16 %v1808, %v1807
      %v1822 = vpack.c.bf16 %v1810, %v1809
      %v1823 = vpack.c.bf16 %v1812, %v1811
      %v1824 = vpack.c.bf16 %v1814, %v1813
      %v1825 = vpack.c.bf16 %v1816, %v1815
      %v1826 = vpack.c.bf16 %v1818, %v1817
      %1827 = vst [vmem:[#allocation2 + $0x4] sm:$0xff] %v1819
      %1828 = vst [vmem:[#allocation2 + $0x14] sm:$0xff] %v1820
      %1829 = vst [vmem:[#allocation2 + $0x24] sm:$0xff] %v1821
      %1830 = vst [vmem:[#allocation2 + $0x34] sm:$0xff] %v1822
      %1831 = vst [vmem:[#allocation2 + $0x44] sm:$0xff] %v1823
      %1832 = vst [vmem:[#allocation2 + $0x54] sm:$0xff] %v1824
      %1833 = vst [vmem:[#allocation2 + $0x64] sm:$0xff] %v1825
      %1834 = vst [vmem:[#allocation2 + $0x74] sm:$0xff] %v1826
      %v1835 = vld [vmem:[#allocation2] sm:$0xff]
      %v1836 = vld [vmem:[#allocation2 + $0x8] sm:$0xf]
      %v1837 = vld [vmem:[#allocation2 + $0x10] sm:$0xff]
      %v1838 = vld [vmem:[#allocation2 + $0x18] sm:$0xf]
      %v1839 = vld [vmem:[#allocation2 + $0x20] sm:$0xff]
      %v1840 = vld [vmem:[#allocation2 + $0x28] sm:$0xf]
      %v1841 = vld [vmem:[#allocation2 + $0x30] sm:$0xff]
      %v1842 = vld [vmem:[#allocation2 + $0x38] sm:$0xf]
      %v1843 = vld [vmem:[#allocation2 + $0x40] sm:$0xff]
      %v1844 = vld [vmem:[#allocation2 + $0x48] sm:$0xf]
      %v1845 = vld [vmem:[#allocation2 + $0x50] sm:$0xff]
      %v1846 = vld [vmem:[#allocation2 + $0x58] sm:$0xf]
      %v1847 = vld [vmem:[#allocation2 + $0x60] sm:$0xff]
      %v1848 = vld [vmem:[#allocation2 + $0x68] sm:$0xf]
      %v1849 = vld [vmem:[#allocation2 + $0x70] sm:$0xff]
      %v1850 = vld [vmem:[#allocation2 + $0x78] sm:$0xf]
      %v1851 = vld [vmem:[#allocation2 + $0x4] sm:$0xff]
      %v1852 = vld [vmem:[#allocation2 + $0xc] sm:$0xf]
      %v1853 = vld [vmem:[#allocation2 + $0x14] sm:$0xff]
      %v1854 = vld [vmem:[#allocation2 + $0x1c] sm:$0xf]
      %v1855 = vld [vmem:[#allocation2 + $0x24] sm:$0xff]
      %v1856 = vld [vmem:[#allocation2 + $0x2c] sm:$0xf]
      %v1857 = vld [vmem:[#allocation2 + $0x34] sm:$0xff]
      %v1858 = vld [vmem:[#allocation2 + $0x3c] sm:$0xf]
      %v1859 = vld [vmem:[#allocation2 + $0x44] sm:$0xff]
      %v1860 = vld [vmem:[#allocation2 + $0x4c] sm:$0xf]
      %v1861 = vld [vmem:[#allocation2 + $0x54] sm:$0xff]
      %v1862 = vld [vmem:[#allocation2 + $0x5c] sm:$0xf]
      %v1863 = vld [vmem:[#allocation2 + $0x64] sm:$0xff]
      %v1864 = vld [vmem:[#allocation2 + $0x6c] sm:$0xf]
      %v1865 = vld [vmem:[#allocation2 + $0x74] sm:$0xff]
      %v1866 = vld [vmem:[#allocation2 + $0x7c] sm:$0xf]
      %v1883 = vunpack.c.l.b16 %v1835
      %v1884 = vunpack.c.h.b16 %v1835
      %v1885 = vunpack.c.l.b16 %v1836
      %v1886 = vunpack.c.l.b16 %v1837
      %v1887 = vunpack.c.h.b16 %v1837
      %v1888 = vunpack.c.l.b16 %v1838
      %v1889 = vunpack.c.l.b16 %v1839
      %v1890 = vunpack.c.h.b16 %v1839
      %v1891 = vunpack.c.l.b16 %v1840
      %v1892 = vunpack.c.l.b16 %v1841
      %v1893 = vunpack.c.h.b16 %v1841
      %v1894 = vunpack.c.l.b16 %v1842
      %v1895 = vunpack.c.l.b16 %v1843
      %v1896 = vunpack.c.h.b16 %v1843
      %v1897 = vunpack.c.l.b16 %v1844
      %v1898 = vunpack.c.l.b16 %v1845
      %v1899 = vunpack.c.h.b16 %v1845
      %v1900 = vunpack.c.l.b16 %v1846
      %v1901 = vunpack.c.l.b16 %v1847
      %v1902 = vunpack.c.h.b16 %v1847
      %v1903 = vunpack.c.l.b16 %v1848
      %v1904 = vunpack.c.l.b16 %v1849
      %v1905 = vunpack.c.h.b16 %v1849
      %v1906 = vunpack.c.l.b16 %v1850
      %v1907 = vpack.c.b16 %v1886, %v1883
      %v1908 = vpack.c.b16 %v1887, %v1884
      %v1909 = vpack.c.b16 %v1888, %v1885
      %v1910 = vpack.c.b16 %v1892, %v1889
      %v1911 = vpack.c.b16 %v1893, %v1890
      %v1912 = vpack.c.b16 %v1894, %v1891
      %v1913 = vpack.c.b16 %v1898, %v1895
      %v1914 = vpack.c.b16 %v1899, %v1896
      %v1915 = vpack.c.b16 %v1900, %v1897
      %v1916 = vpack.c.b16 %v1904, %v1901
      %v1917 = vpack.c.b16 %v1905, %v1902
      %v1918 = vpack.c.b16 %v1906, %v1903
      %1931 = vrot.lane.b32.xlu0 %v1907, 112
      %v1932 = vpop.permute.xlu0 %1931
      %1933 = vrot.lane.b32.xlu0 %v1908, 112
      %v1934 = vpop.permute.xlu0 %1933
      %1935 = vrot.lane.b32.xlu0 %v1909, 112
      %v1936 = vpop.permute.xlu0 %1935
      %1937 = vrot.lane.b32.xlu0 %v1910, 112
      %v1938 = vpop.permute.xlu0 %1937
      %1939 = vrot.lane.b32.xlu0 %v1911, 112
      %v1940 = vpop.permute.xlu0 %1939
      %1941 = vrot.lane.b32.xlu0 %v1912, 112
      %v1942 = vpop.permute.xlu0 %1941
      %1943 = vrot.lane.b32.xlu0 %v1913, 112
      %v1944 = vpop.permute.xlu0 %1943
      %1945 = vrot.lane.b32.xlu0 %v1914, 112
      %v1946 = vpop.permute.xlu0 %1945
      %1947 = vrot.lane.b32.xlu0 %v1915, 112
      %v1948 = vpop.permute.xlu0 %1947
      %1949 = vrot.lane.b32.xlu0 %v1916, 112
      %v1950 = vpop.permute.xlu0 %1949
      %1951 = vrot.lane.b32.xlu0 %v1917, 112
      %v1952 = vpop.permute.xlu0 %1951
      %1953 = vrot.lane.b32.xlu0 %v1918, 112
      %v1954 = vpop.permute.xlu0 %1953
      %v1955 = vsel %vm405, %v1932, %v1934
      %v1956 = vsel %vm405, %v1934, %v1936
      %v1957 = vsel %vm405, %v1938, %v1940
      %v1958 = vsel %vm405, %v1940, %v1942
      %v1959 = vsel %vm405, %v1944, %v1946
      %v1960 = vsel %vm405, %v1946, %v1948
      %v1961 = vsel %vm405, %v1950, %v1952
      %v1962 = vsel %vm405, %v1952, %v1954
      %v1991 = vunpack.c.l.b16 %v1851
      %v1992 = vunpack.c.h.b16 %v1851
      %v1993 = vunpack.c.l.b16 %v1852
      %v1994 = vunpack.c.l.b16 %v1853
      %v1995 = vunpack.c.h.b16 %v1853
      %v1996 = vunpack.c.l.b16 %v1854
      %v1997 = vunpack.c.l.b16 %v1855
      %v1998 = vunpack.c.h.b16 %v1855
      %v1999 = vunpack.c.l.b16 %v1856
      %v2000 = vunpack.c.l.b16 %v1857
      %v2001 = vunpack.c.h.b16 %v1857
      %v2002 = vunpack.c.l.b16 %v1858
      %v2003 = vunpack.c.l.b16 %v1859
      %v2004 = vunpack.c.h.b16 %v1859
      %v2005 = vunpack.c.l.b16 %v1860
      %v2006 = vunpack.c.l.b16 %v1861
      %v2007 = vunpack.c.h.b16 %v1861
      %v2008 = vunpack.c.l.b16 %v1862
      %v2009 = vunpack.c.l.b16 %v1863
      %v2010 = vunpack.c.h.b16 %v1863
      %v2011 = vunpack.c.l.b16 %v1864
      %v2012 = vunpack.c.l.b16 %v1865
      %v2013 = vunpack.c.h.b16 %v1865
      %v2014 = vunpack.c.l.b16 %v1866
      %v2015 = vpack.c.b16 %v1994, %v1991
      %v2016 = vpack.c.b16 %v1995, %v1992
      %v2017 = vpack.c.b16 %v1996, %v1993
      %v2018 = vpack.c.b16 %v2000, %v1997
      %v2019 = vpack.c.b16 %v2001, %v1998
      %v2020 = vpack.c.b16 %v2002, %v1999
      %v2021 = vpack.c.b16 %v2006, %v2003
      %v2022 = vpack.c.b16 %v2007, %v2004
      %v2023 = vpack.c.b16 %v2008, %v2005
      %v2024 = vpack.c.b16 %v2012, %v2009
      %v2025 = vpack.c.b16 %v2013, %v2010
      %v2026 = vpack.c.b16 %v2014, %v2011
      %2027 = vrot.lane.b32.xlu0 %v2015, 96
      %v2028 = vpop.permute.xlu0 %2027
      %2029 = vrot.lane.b32.xlu0 %v2016, 96
      %v2030 = vpop.permute.xlu0 %2029
      %2031 = vrot.lane.b32.xlu0 %v2017, 96
      %v2032 = vpop.permute.xlu0 %2031
      %2033 = vrot.lane.b32.xlu0 %v2018, 96
      %v2034 = vpop.permute.xlu0 %2033
      %2035 = vrot.lane.b32.xlu0 %v2019, 96
      %v2036 = vpop.permute.xlu0 %2035
      %2037 = vrot.lane.b32.xlu0 %v2020, 96
      %v2038 = vpop.permute.xlu0 %2037
      %2039 = vrot.lane.b32.xlu0 %v2021, 96
      %v2040 = vpop.permute.xlu0 %2039
      %2041 = vrot.lane.b32.xlu0 %v2022, 96
      %v2042 = vpop.permute.xlu0 %2041
      %2043 = vrot.lane.b32.xlu0 %v2023, 96
      %v2044 = vpop.permute.xlu0 %2043
      %2045 = vrot.lane.b32.xlu0 %v2024, 96
      %v2046 = vpop.permute.xlu0 %2045
      %2047 = vrot.lane.b32.xlu0 %v2025, 96
      %v2048 = vpop.permute.xlu0 %2047
      %2049 = vrot.lane.b32.xlu0 %v2026, 96
      %v2050 = vpop.permute.xlu0 %2049
      %v2051 = vsel %vm502, %v2028, %v2030
      %v2052 = vsel %vm502, %v2030, %v2032
      %v2053 = vsel %vm502, %v2034, %v2036
      %v2054 = vsel %vm502, %v2036, %v2038
      %v2055 = vsel %vm502, %v2040, %v2042
      %v2056 = vsel %vm502, %v2042, %v2044
      %v2057 = vsel %vm502, %v2046, %v2048
      %v2058 = vsel %vm502, %v2048, %v2050
      %v2071 = vsel %vm543, %v1907, 0
      %v2072 = vsel %vm550, %v1908, 0
      %v2073 = vsel %vm557, %v1909, 0
      %v2074 = vsel %vm543, %v1910, 0
      %v2075 = vsel %vm550, %v1911, 0
      %v2076 = vsel %vm557, %v1912, 0
      %v2077 = vsel %vm543, %v1913, 0
      %v2078 = vsel %vm550, %v1914, 0
      %v2079 = vsel %vm557, %v1915, 0
      %v2080 = vsel %vm543, %v1916, 0
      %v2081 = vsel %vm550, %v1917, 0
      %v2082 = vsel %vm557, %v1918, 0
      %v2083 = vsel %vm543, %v1955, 0
      %v2084 = vsel %vm550, %v1956, 0
      %v2085 = vsel %vm557, %v1936, 0
      %v2086 = vsel %vm543, %v1957, 0
      %v2087 = vsel %vm550, %v1958, 0
      %v2088 = vsel %vm557, %v1942, 0
      %v2089 = vsel %vm543, %v1959, 0
      %v2090 = vsel %vm550, %v1960, 0
      %v2091 = vsel %vm557, %v1948, 0
      %v2092 = vsel %vm543, %v1961, 0
      %v2093 = vsel %vm550, %v1962, 0
      %v2094 = vsel %vm557, %v1954, 0
      %v2095 = vsel %vm543, %v2028, 0
      %v2096 = vsel %vm550, %v2051, 0
      %v2097 = vsel %vm557, %v2052, 0
      %v2098 = vsel %vm543, %v2034, 0
      %v2099 = vsel %vm550, %v2053, 0
      %v2100 = vsel %vm557, %v2054, 0
      %v2101 = vsel %vm543, %v2040, 0
      %v2102 = vsel %vm550, %v2055, 0
      %v2103 = vsel %vm557, %v2056, 0
      %v2104 = vsel %vm543, %v2046, 0
      %v2105 = vsel %vm550, %v2057, 0
      %v2106 = vsel %vm557, %v2058, 0
      %v2107 = vld [vmem:[%s3] sm:$0xff]
      %v2108 = vld [vmem:[%s3 + $0x8] sm:$0xff]
      %v2109 = vld [vmem:[%s3 + $0x10] sm:$0xff]
      %v2110 = vld [vmem:[%s3 + $0x18] sm:$0xff]
      %v2111 = vld [vmem:[%s3 + $0x20] sm:$0xff]
      %v2112 = vld [vmem:[%s3 + $0x28] sm:$0xff]
      %v2113 = vld [vmem:[%s3 + $0x30] sm:$0xff]
      %v2114 = vld [vmem:[%s3 + $0x38] sm:$0xff]
      %v2115 = vld [vmem:[#allocation2 + $0x4] sm:$0xff]
      %v2116 = vld [vmem:[#allocation2 + $0x14] sm:$0xff]
      %v2117 = vld [vmem:[#allocation2 + $0x24] sm:$0xff]
      %v2118 = vld [vmem:[#allocation2 + $0x34] sm:$0xff]
      %v2119 = vld [vmem:[#allocation2 + $0x44] sm:$0xff]
      %v2120 = vld [vmem:[#allocation2 + $0x54] sm:$0xff]
      %v2121 = vld [vmem:[#allocation2 + $0x64] sm:$0xff]
      %v2122 = vld [vmem:[#allocation2 + $0x74] sm:$0xff]
      %v2131 = vunpack.c.l.b16 %v2115
      %v2132 = vunpack.c.h.b16 %v2115
      %v2133 = vunpack.c.l.b16 %v2116
      %v2134 = vunpack.c.h.b16 %v2116
      %v2135 = vunpack.c.l.b16 %v2117
      %v2136 = vunpack.c.h.b16 %v2117
      %v2137 = vunpack.c.l.b16 %v2118
      %v2138 = vunpack.c.h.b16 %v2118
      %v2139 = vunpack.c.l.b16 %v2119
      %v2140 = vunpack.c.h.b16 %v2119
      %v2141 = vunpack.c.l.b16 %v2120
      %v2142 = vunpack.c.h.b16 %v2120
      %v2143 = vunpack.c.l.b16 %v2121
      %v2144 = vunpack.c.h.b16 %v2121
      %v2145 = vunpack.c.l.b16 %v2122
      %v2146 = vunpack.c.h.b16 %v2122
      %v2147 = vpack.c.b16 %v2133, %v2131
      %v2148 = vpack.c.b16 %v2134, %v2132
      %v2149 = vpack.c.b16 %v2137, %v2135
      %v2150 = vpack.c.b16 %v2138, %v2136
      %v2151 = vpack.c.b16 %v2141, %v2139
      %v2152 = vpack.c.b16 %v2142, %v2140
      %v2153 = vpack.c.b16 %v2145, %v2143
      %v2154 = vpack.c.b16 %v2146, %v2144
      %2155 = vrot.lane.b32.xlu0 %v2147, 112
      %v2156 = vpop.permute.xlu0 %2155
      %2157 = vrot.lane.b32.xlu0 %v2148, 112
      %v2158 = vpop.permute.xlu0 %2157
      %2159 = vrot.lane.b32.xlu0 %v2149, 112
      %v2160 = vpop.permute.xlu0 %2159
      %2161 = vrot.lane.b32.xlu0 %v2150, 112
      %v2162 = vpop.permute.xlu0 %2161
      %2163 = vrot.lane.b32.xlu0 %v2151, 112
      %v2164 = vpop.permute.xlu0 %2163
      %2165 = vrot.lane.b32.xlu0 %v2152, 112
      %v2166 = vpop.permute.xlu0 %2165
      %2167 = vrot.lane.b32.xlu0 %v2153, 112
      %v2168 = vpop.permute.xlu0 %2167
      %2169 = vrot.lane.b32.xlu0 %v2154, 112
      %v2170 = vpop.permute.xlu0 %2169
      %v2171 = vsel %vm405, %v2156, %v2158
      %v2172 = vsel %vm405, %v2160, %v2162
      %v2173 = vsel %vm405, %v2164, %v2166
      %v2174 = vsel %vm405, %v2168, %v2170
      %s2175 = scalar_lea.vmem %s3, 64
      %v2176 = vld [vmem:[%s2175] sm:$0xff]
      %v2177 = vld [vmem:[%s2175 + $0x8] sm:$0xff]
      %v2178 = vld [vmem:[%s2175 + $0x10] sm:$0xff]
      %v2179 = vld [vmem:[%s2175 + $0x18] sm:$0xff]
      %v2180 = vld [vmem:[%s2175 + $0x20] sm:$0xff]
      %v2181 = vld [vmem:[%s2175 + $0x28] sm:$0xff]
      %v2182 = vld [vmem:[%s2175 + $0x30] sm:$0xff]
      %v2183 = vld [vmem:[%s2175 + $0x38] sm:$0xff]
      %v2192 = vunpack.c.l.b16 %v2176
      %v2193 = vunpack.c.h.b16 %v2176
      %v2194 = vunpack.c.l.b16 %v2177
      %v2195 = vunpack.c.h.b16 %v2177
      %v2196 = vunpack.c.l.b16 %v2178
      %v2197 = vunpack.c.h.b16 %v2178
      %v2198 = vunpack.c.l.b16 %v2179
      %v2199 = vunpack.c.h.b16 %v2179
      %v2200 = vunpack.c.l.b16 %v2180
      %v2201 = vunpack.c.h.b16 %v2180
      %v2202 = vunpack.c.l.b16 %v2181
      %v2203 = vunpack.c.h.b16 %v2181
      %v2204 = vunpack.c.l.b16 %v2182
      %v2205 = vunpack.c.h.b16 %v2182
      %v2206 = vunpack.c.l.b16 %v2183
      %v2207 = vunpack.c.h.b16 %v2183
      %v2208 = vpack.c.b16 %v2194, %v2192
      %v2209 = vpack.c.b16 %v2195, %v2193
      %v2210 = vpack.c.b16 %v2198, %v2196
      %v2211 = vpack.c.b16 %v2199, %v2197
      %v2212 = vpack.c.b16 %v2202, %v2200
      %v2213 = vpack.c.b16 %v2203, %v2201
      %v2214 = vpack.c.b16 %v2206, %v2204
      %v2215 = vpack.c.b16 %v2207, %v2205
      %2220 = vrot.lane.b32.xlu0 %v1907, 16
      %v2221 = vpop.permute.xlu0 %2220
      %2222 = vrot.lane.b32.xlu0 %v1908, 16
      %v2223 = vpop.permute.xlu0 %2222
      %2224 = vrot.lane.b32.xlu0 %v1909, 16
      %v2225 = vpop.permute.xlu0 %2224
      %2226 = vrot.lane.b32.xlu0 %v1910, 16
      %v2227 = vpop.permute.xlu0 %2226
      %2228 = vrot.lane.b32.xlu0 %v1911, 16
      %v2229 = vpop.permute.xlu0 %2228
      %2230 = vrot.lane.b32.xlu0 %v1912, 16
      %v2231 = vpop.permute.xlu0 %2230
      %2232 = vrot.lane.b32.xlu0 %v1913, 16
      %v2233 = vpop.permute.xlu0 %2232
      %2234 = vrot.lane.b32.xlu0 %v1914, 16
      %v2235 = vpop.permute.xlu0 %2234
      %2236 = vrot.lane.b32.xlu0 %v1915, 16
      %v2237 = vpop.permute.xlu0 %2236
      %2238 = vrot.lane.b32.xlu0 %v1916, 16
      %v2239 = vpop.permute.xlu0 %2238
      %2240 = vrot.lane.b32.xlu0 %v1917, 16
      %v2241 = vpop.permute.xlu0 %2240
      %2242 = vrot.lane.b32.xlu0 %v1918, 16
      %v2243 = vpop.permute.xlu0 %2242
      %2244 = vrot.lane.b32.xlu0 %v2156, 16
      %v2245 = vpop.permute.xlu0 %2244
      %2246 = vrot.lane.b32.xlu0 %v2171, 16
      %v2247 = vpop.permute.xlu0 %2246
      %2248 = vrot.lane.b32.xlu0 %v2158, 16
      %v2249 = vpop.permute.xlu0 %2248
      %2250 = vrot.lane.b32.xlu0 %v2160, 16
      %v2251 = vpop.permute.xlu0 %2250
      %2252 = vrot.lane.b32.xlu0 %v2172, 16
      %v2253 = vpop.permute.xlu0 %2252
      %2254 = vrot.lane.b32.xlu0 %v2162, 16
      %v2255 = vpop.permute.xlu0 %2254
      %2256 = vrot.lane.b32.xlu0 %v2164, 16
      %v2257 = vpop.permute.xlu0 %2256
      %2258 = vrot.lane.b32.xlu0 %v2173, 16
      %v2259 = vpop.permute.xlu0 %2258
      %2260 = vrot.lane.b32.xlu0 %v2166, 16
      %v2261 = vpop.permute.xlu0 %2260
      %2262 = vrot.lane.b32.xlu0 %v2168, 16
      %v2263 = vpop.permute.xlu0 %2262
      %2264 = vrot.lane.b32.xlu0 %v2174, 16
      %v2265 = vpop.permute.xlu0 %2264
      %2266 = vrot.lane.b32.xlu0 %v2170, 16
      %v2267 = vpop.permute.xlu0 %2266
      %2268 = vrot.lane.b32.xlu0 %v2028, 16
      %v2269 = vpop.permute.xlu0 %2268
      %2270 = vrot.lane.b32.xlu0 %v2051, 16
      %v2271 = vpop.permute.xlu0 %2270
      %2272 = vrot.lane.b32.xlu0 %v2052, 16
      %v2273 = vpop.permute.xlu0 %2272
      %2274 = vrot.lane.b32.xlu0 %v2034, 16
      %v2275 = vpop.permute.xlu0 %2274
      %2276 = vrot.lane.b32.xlu0 %v2053, 16
      %v2277 = vpop.permute.xlu0 %2276
      %2278 = vrot.lane.b32.xlu0 %v2054, 16
      %v2279 = vpop.permute.xlu0 %2278
      %2280 = vrot.lane.b32.xlu0 %v2040, 16
      %v2281 = vpop.permute.xlu0 %2280
      %2282 = vrot.lane.b32.xlu0 %v2055, 16
      %v2283 = vpop.permute.xlu0 %2282
      %2284 = vrot.lane.b32.xlu0 %v2056, 16
      %v2285 = vpop.permute.xlu0 %2284
      %2286 = vrot.lane.b32.xlu0 %v2046, 16
      %v2287 = vpop.permute.xlu0 %2286
      %2288 = vrot.lane.b32.xlu0 %v2057, 16
      %v2289 = vpop.permute.xlu0 %2288
      %2290 = vrot.lane.b32.xlu0 %v2058, 16
      %v2291 = vpop.permute.xlu0 %2290
      %v2292 = vsel %vm779, %v2221, %v2223
      %v2293 = vsel %vm779, %v2223, %v2225
      %v2294 = vsel %vm779, %v2227, %v2229
      %v2295 = vsel %vm779, %v2229, %v2231
      %v2296 = vsel %vm779, %v2233, %v2235
      %v2297 = vsel %vm779, %v2235, %v2237
      %v2298 = vsel %vm779, %v2239, %v2241
      %v2299 = vsel %vm779, %v2241, %v2243
      %v2300 = vsel %vm779, %v2245, %v2247
      %v2301 = vsel %vm779, %v2247, %v2249
      %v2302 = vsel %vm779, %v2251, %v2253
      %v2303 = vsel %vm779, %v2253, %v2255
      %v2304 = vsel %vm779, %v2257, %v2259
      %v2305 = vsel %vm779, %v2259, %v2261
      %v2306 = vsel %vm779, %v2263, %v2265
      %v2307 = vsel %vm779, %v2265, %v2267
      %v2308 = vsel %vm779, %v2269, %v2271
      %v2309 = vsel %vm779, %v2271, %v2273
      %v2310 = vsel %vm779, %v2275, %v2277
      %v2311 = vsel %vm779, %v2277, %v2279
      %v2312 = vsel %vm779, %v2281, %v2283
      %v2313 = vsel %vm779, %v2283, %v2285
      %v2314 = vsel %vm779, %v2287, %v2289
      %v2315 = vsel %vm779, %v2289, %v2291
      %v2341 = vsel %vm828, %v2209, 0
      %v2344 = vsel %vm828, %v2211, 0
      %v2347 = vsel %vm828, %v2213, 0
      %v2350 = vsel %vm828, %v2215, 0
      %2352 = vmatpush.bf16.msra.mxu0 %v2306
      %2353 = vmatpush.bf16.msra.mxu0 %v2304
      %2354 = vmatpush.bf16.msra.mxu0 %v2302
      %2355 = vmatpush.bf16.msra.mxu0 %v2300
      %2356 = vmatpush.bf16.msra.mxu0 %v2298
      %2357 = vmatpush.bf16.msra.mxu0 %v2296
      %2358 = vmatpush.bf16.msra.mxu0 %v2294
      %2359 = vmatpush.bf16.msra.mxu0 %v2292
      %2360 = vmatmul.bf16.gmra.mxu0 %v2208
      %v2361 = vpop.f32.mrf.mxu0
      %v2362 = vadd.f32 0.0, %v2361
      %v2363 = vpop.f32.mrf.mxu0
      %v2364 = vadd.f32 0.0, %v2363
      %2365 = vmatmul.bf16.gmra.mxu0 %v2210
      %v2366 = vpop.f32.mrf.mxu0
      %v2367 = vadd.f32 0.0, %v2366
      %v2368 = vpop.f32.mrf.mxu0
      %v2369 = vadd.f32 0.0, %v2368
      %2370 = vmatmul.bf16.gmra.mxu0 %v2212
      %v2371 = vpop.f32.mrf.mxu0
      %v2372 = vadd.f32 0.0, %v2371
      %v2373 = vpop.f32.mrf.mxu0
      %v2374 = vadd.f32 0.0, %v2373
      %2375 = vmatmul.bf16.gmra.mxu0 %v2214
      %v2376 = vpop.f32.mrf.mxu0
      %v2377 = vadd.f32 0.0, %v2376
      %v2378 = vpop.f32.mrf.mxu0
      %v2379 = vadd.f32 0.0, %v2378
      %2380 = vdwg.mxu0
      %2381 = vmatpush.bf16.msra.mxu0 0
      %2382 = vmatpush.bf16.msra.mxu0 0
      %2383 = vmatpush.bf16.msra.mxu0 0
      %2384 = vmatpush.bf16.msra.mxu0 0
      %2385 = vmatpush.bf16.msra.mxu0 %v2314
      %2386 = vmatpush.bf16.msra.mxu0 %v2312
      %2387 = vmatpush.bf16.msra.mxu0 %v2310
      %2388 = vmatpush.bf16.msra.mxu0 %v2308
      %2389 = vmatmul.bf16.gmra.mxu0 %v2341
      %v2390 = vpop.f32.mrf.mxu0
      %v2391 = vadd.f32 %v2362, %v2390
      %v2392 = vpop.f32.mrf.mxu0
      %v2393 = vadd.f32 %v2364, %v2392
      %2394 = vmatmul.bf16.gmra.mxu0 %v2344
      %v2395 = vpop.f32.mrf.mxu0
      %v2396 = vadd.f32 %v2367, %v2395
      %v2397 = vpop.f32.mrf.mxu0
      %v2398 = vadd.f32 %v2369, %v2397
      %2399 = vmatmul.bf16.gmra.mxu0 %v2347
      %v2400 = vpop.f32.mrf.mxu0
      %v2401 = vadd.f32 %v2372, %v2400
      %v2402 = vpop.f32.mrf.mxu0
      %v2403 = vadd.f32 %v2374, %v2402
      %2404 = vmatmul.bf16.gmra.mxu0 %v2350
      %v2405 = vpop.f32.mrf.mxu0
      %v2406 = vadd.f32 %v2377, %v2405
      %v2407 = vpop.f32.mrf.mxu0
      %v2408 = vadd.f32 %v2379, %v2407
      %2409 = vdwg.mxu0
      %2410 = vmatpush.bf16.msra.mxu0 %v2307
      %2411 = vmatpush.bf16.msra.mxu0 %v2305
      %2412 = vmatpush.bf16.msra.mxu0 %v2303
      %2413 = vmatpush.bf16.msra.mxu0 %v2301
      %2414 = vmatpush.bf16.msra.mxu0 %v2299
      %2415 = vmatpush.bf16.msra.mxu0 %v2297
      %2416 = vmatpush.bf16.msra.mxu0 %v2295
      %2417 = vmatpush.bf16.msra.mxu0 %v2293
      %2418 = vmatmul.bf16.gmra.mxu0 %v2208
      %v2419 = vpop.f32.mrf.mxu0
      %v2420 = vadd.f32 0.0, %v2419
      %v2421 = vpop.f32.mrf.mxu0
      %v2422 = vadd.f32 0.0, %v2421
      %2423 = vmatmul.bf16.gmra.mxu0 %v2210
      %v2424 = vpop.f32.mrf.mxu0
      %v2425 = vadd.f32 0.0, %v2424
      %v2426 = vpop.f32.mrf.mxu0
      %v2427 = vadd.f32 0.0, %v2426
      %2428 = vmatmul.bf16.gmra.mxu0 %v2212
      %v2429 = vpop.f32.mrf.mxu0
      %v2430 = vadd.f32 0.0, %v2429
      %v2431 = vpop.f32.mrf.mxu0
      %v2432 = vadd.f32 0.0, %v2431
      %2433 = vmatmul.bf16.gmra.mxu0 %v2214
      %v2434 = vpop.f32.mrf.mxu0
      %v2435 = vadd.f32 0.0, %v2434
      %v2436 = vpop.f32.mrf.mxu0
      %v2437 = vadd.f32 0.0, %v2436
      %2438 = vdwg.mxu0
      %2439 = vmatpush.bf16.msra.mxu0 0
      %2440 = vmatpush.bf16.msra.mxu0 0
      %2441 = vmatpush.bf16.msra.mxu0 0
      %2442 = vmatpush.bf16.msra.mxu0 0
      %2443 = vmatpush.bf16.msra.mxu0 %v2315
      %2444 = vmatpush.bf16.msra.mxu0 %v2313
      %2445 = vmatpush.bf16.msra.mxu0 %v2311
      %2446 = vmatpush.bf16.msra.mxu0 %v2309
      %2447 = vmatmul.bf16.gmra.mxu0 %v2341
      %v2448 = vpop.f32.mrf.mxu0
      %v2449 = vadd.f32 %v2420, %v2448
      %v2450 = vpop.f32.mrf.mxu0
      %v2451 = vadd.f32 %v2422, %v2450
      %2452 = vmatmul.bf16.gmra.mxu0 %v2344
      %v2453 = vpop.f32.mrf.mxu0
      %v2454 = vadd.f32 %v2425, %v2453
      %v2455 = vpop.f32.mrf.mxu0
      %v2456 = vadd.f32 %v2427, %v2455
      %2457 = vmatmul.bf16.gmra.mxu0 %v2347
      %v2458 = vpop.f32.mrf.mxu0
      %v2459 = vadd.f32 %v2430, %v2458
      %v2460 = vpop.f32.mrf.mxu0
      %v2461 = vadd.f32 %v2432, %v2460
      %2462 = vmatmul.bf16.gmra.mxu0 %v2350
      %v2463 = vpop.f32.mrf.mxu0
      %v2464 = vadd.f32 %v2435, %v2463
      %v2465 = vpop.f32.mrf.mxu0
      %v2466 = vadd.f32 %v2437, %v2465
      %2467 = vdwg.mxu0
      %v2476 = vunpack.c.l.b16 %v2107
      %v2477 = vunpack.c.h.b16 %v2107
      %v2478 = vunpack.c.l.b16 %v2108
      %v2479 = vunpack.c.h.b16 %v2108
      %v2480 = vunpack.c.l.b16 %v2109
      %v2481 = vunpack.c.h.b16 %v2109
      %v2482 = vunpack.c.l.b16 %v2110
      %v2483 = vunpack.c.h.b16 %v2110
      %v2484 = vunpack.c.l.b16 %v2111
      %v2485 = vunpack.c.h.b16 %v2111
      %v2486 = vunpack.c.l.b16 %v2112
      %v2487 = vunpack.c.h.b16 %v2112
      %v2488 = vunpack.c.l.b16 %v2113
      %v2489 = vunpack.c.h.b16 %v2113
      %v2490 = vunpack.c.l.b16 %v2114
      %v2491 = vunpack.c.h.b16 %v2114
      %v2492 = vpack.c.b16 %v2478, %v2476
      %v2493 = vpack.c.b16 %v2479, %v2477
      %v2494 = vpack.c.b16 %v2482, %v2480
      %v2495 = vpack.c.b16 %v2483, %v2481
      %v2496 = vpack.c.b16 %v2486, %v2484
      %v2497 = vpack.c.b16 %v2487, %v2485
      %v2498 = vpack.c.b16 %v2490, %v2488
      %v2499 = vpack.c.b16 %v2491, %v2489
      %2540 = vrot.lane.b32.xlu0 %v2071, 17
      %v2541 = vpop.permute.xlu0 %2540
      %2542 = vrot.lane.b32.xlu0 %v2072, 17
      %v2543 = vpop.permute.xlu0 %2542
      %2544 = vrot.lane.b32.xlu0 %v2073, 17
      %v2545 = vpop.permute.xlu0 %2544
      %2546 = vrot.lane.b32.xlu0 %v2074, 17
      %v2547 = vpop.permute.xlu0 %2546
      %2548 = vrot.lane.b32.xlu0 %v2075, 17
      %v2549 = vpop.permute.xlu0 %2548
      %2550 = vrot.lane.b32.xlu0 %v2076, 17
      %v2551 = vpop.permute.xlu0 %2550
      %2552 = vrot.lane.b32.xlu0 %v2077, 17
      %v2553 = vpop.permute.xlu0 %2552
      %2554 = vrot.lane.b32.xlu0 %v2078, 17
      %v2555 = vpop.permute.xlu0 %2554
      %2556 = vrot.lane.b32.xlu0 %v2079, 17
      %v2557 = vpop.permute.xlu0 %2556
      %2558 = vrot.lane.b32.xlu0 %v2080, 17
      %v2559 = vpop.permute.xlu0 %2558
      %2560 = vrot.lane.b32.xlu0 %v2081, 17
      %v2561 = vpop.permute.xlu0 %2560
      %2562 = vrot.lane.b32.xlu0 %v2082, 17
      %v2563 = vpop.permute.xlu0 %2562
      %2564 = vrot.lane.b32.xlu0 %v2083, 17
      %v2565 = vpop.permute.xlu0 %2564
      %2566 = vrot.lane.b32.xlu0 %v2084, 17
      %v2567 = vpop.permute.xlu0 %2566
      %2568 = vrot.lane.b32.xlu0 %v2085, 17
      %v2569 = vpop.permute.xlu0 %2568
      %2570 = vrot.lane.b32.xlu0 %v2086, 17
      %v2571 = vpop.permute.xlu0 %2570
      %2572 = vrot.lane.b32.xlu0 %v2087, 17
      %v2573 = vpop.permute.xlu0 %2572
      %2574 = vrot.lane.b32.xlu0 %v2088, 17
      %v2575 = vpop.permute.xlu0 %2574
      %2576 = vrot.lane.b32.xlu0 %v2089, 17
      %v2577 = vpop.permute.xlu0 %2576
      %2578 = vrot.lane.b32.xlu0 %v2090, 17
      %v2579 = vpop.permute.xlu0 %2578
      %2580 = vrot.lane.b32.xlu0 %v2091, 17
      %v2581 = vpop.permute.xlu0 %2580
      %2582 = vrot.lane.b32.xlu0 %v2092, 17
      %v2583 = vpop.permute.xlu0 %2582
      %2584 = vrot.lane.b32.xlu0 %v2093, 17
      %v2585 = vpop.permute.xlu0 %2584
      %2586 = vrot.lane.b32.xlu0 %v2094, 17
      %v2587 = vpop.permute.xlu0 %2586
      %2588 = vrot.lane.b32.xlu0 %v2095, 17
      %v2589 = vpop.permute.xlu0 %2588
      %2590 = vrot.lane.b32.xlu0 %v2096, 17
      %v2591 = vpop.permute.xlu0 %2590
      %2592 = vrot.lane.b32.xlu0 %v2097, 17
      %v2593 = vpop.permute.xlu0 %2592
      %2594 = vrot.lane.b32.xlu0 %v2098, 17
      %v2595 = vpop.permute.xlu0 %2594
      %2596 = vrot.lane.b32.xlu0 %v2099, 17
      %v2597 = vpop.permute.xlu0 %2596
      %2598 = vrot.lane.b32.xlu0 %v2100, 17
      %v2599 = vpop.permute.xlu0 %2598
      %2600 = vrot.lane.b32.xlu0 %v2101, 17
      %v2601 = vpop.permute.xlu0 %2600
      %2602 = vrot.lane.b32.xlu0 %v2102, 17
      %v2603 = vpop.permute.xlu0 %2602
      %2604 = vrot.lane.b32.xlu0 %v2103, 17
      %v2605 = vpop.permute.xlu0 %2604
      %2606 = vrot.lane.b32.xlu0 %v2104, 17
      %v2607 = vpop.permute.xlu0 %2606
      %2608 = vrot.lane.b32.xlu0 %v2105, 17
      %v2609 = vpop.permute.xlu0 %2608
      %2610 = vrot.lane.b32.xlu0 %v2106, 17
      %v2611 = vpop.permute.xlu0 %2610
      %v2612 = vsel %vm1101, %v2541, %v2543
      %v2613 = vsel %vm1101, %v2543, %v2545
      %v2614 = vsel %vm1101, %v2547, %v2549
      %v2615 = vsel %vm1101, %v2549, %v2551
      %v2616 = vsel %vm1101, %v2553, %v2555
      %v2617 = vsel %vm1101, %v2555, %v2557
      %v2618 = vsel %vm1101, %v2559, %v2561
      %v2619 = vsel %vm1101, %v2561, %v2563
      %v2620 = vsel %vm1101, %v2565, %v2567
      %v2621 = vsel %vm1101, %v2567, %v2569
      %v2622 = vsel %vm1101, %v2571, %v2573
      %v2623 = vsel %vm1101, %v2573, %v2575
      %v2624 = vsel %vm1101, %v2577, %v2579
      %v2625 = vsel %vm1101, %v2579, %v2581
      %v2626 = vsel %vm1101, %v2583, %v2585
      %v2627 = vsel %vm1101, %v2585, %v2587
      %v2628 = vsel %vm1101, %v2589, %v2591
      %v2629 = vsel %vm1101, %v2591, %v2593
      %v2630 = vsel %vm1101, %v2595, %v2597
      %v2631 = vsel %vm1101, %v2597, %v2599
      %v2632 = vsel %vm1101, %v2601, %v2603
      %v2633 = vsel %vm1101, %v2603, %v2605
      %v2634 = vsel %vm1101, %v2607, %v2609
      %v2635 = vsel %vm1101, %v2609, %v2611
      %v2661 = vsel %vm828, %v2493, 0
      %v2664 = vsel %vm828, %v2495, 0
      %v2667 = vsel %vm828, %v2497, 0
      %v2670 = vsel %vm828, %v2499, 0
      %2672 = vmatpush.bf16.msra.mxu0 %v2626
      %2673 = vmatpush.bf16.msra.mxu0 %v2624
      %2674 = vmatpush.bf16.msra.mxu0 %v2622
      %2675 = vmatpush.bf16.msra.mxu0 %v2620
      %2676 = vmatpush.bf16.msra.mxu0 %v2618
      %2677 = vmatpush.bf16.msra.mxu0 %v2616
      %2678 = vmatpush.bf16.msra.mxu0 %v2614
      %2679 = vmatpush.bf16.msra.mxu0 %v2612
      %2680 = vmatmul.bf16.gmra.mxu0 %v2492
      %v2681 = vpop.f32.mrf.mxu0
      %v2682 = vadd.f32 %v2391, %v2681
      %v2683 = vpop.f32.mrf.mxu0
      %v2684 = vadd.f32 %v2393, %v2683
      %2685 = vmatmul.bf16.gmra.mxu0 %v2494
      %v2686 = vpop.f32.mrf.mxu0
      %v2687 = vadd.f32 %v2396, %v2686
      %v2688 = vpop.f32.mrf.mxu0
      %v2689 = vadd.f32 %v2398, %v2688
      %2690 = vmatmul.bf16.gmra.mxu0 %v2496
      %v2691 = vpop.f32.mrf.mxu0
      %v2692 = vadd.f32 %v2401, %v2691
      %v2693 = vpop.f32.mrf.mxu0
      %v2694 = vadd.f32 %v2403, %v2693
      %2695 = vmatmul.bf16.gmra.mxu0 %v2498
      %v2696 = vpop.f32.mrf.mxu0
      %v2697 = vadd.f32 %v2406, %v2696
      %v2698 = vpop.f32.mrf.mxu0
      %v2699 = vadd.f32 %v2408, %v2698
      %2700 = vdwg.mxu0
      %2701 = vmatpush.bf16.msra.mxu0 0
      %2702 = vmatpush.bf16.msra.mxu0 0
      %2703 = vmatpush.bf16.msra.mxu0 0
      %2704 = vmatpush.bf16.msra.mxu0 0
      %2705 = vmatpush.bf16.msra.mxu0 %v2634
      %2706 = vmatpush.bf16.msra.mxu0 %v2632
      %2707 = vmatpush.bf16.msra.mxu0 %v2630
      %2708 = vmatpush.bf16.msra.mxu0 %v2628
      %2709 = vmatmul.bf16.gmra.mxu0 %v2661
      %v2710 = vpop.f32.mrf.mxu0
      %v2711 = vadd.f32 %v2682, %v2710
      %v2712 = vpop.f32.mrf.mxu0
      %v2713 = vadd.f32 %v2684, %v2712
      %2714 = vmatmul.bf16.gmra.mxu0 %v2664
      %v2715 = vpop.f32.mrf.mxu0
      %v2716 = vadd.f32 %v2687, %v2715
      %v2717 = vpop.f32.mrf.mxu0
      %v2718 = vadd.f32 %v2689, %v2717
      %2719 = vmatmul.bf16.gmra.mxu0 %v2667
      %v2720 = vpop.f32.mrf.mxu0
      %v2721 = vadd.f32 %v2692, %v2720
      %v2722 = vpop.f32.mrf.mxu0
      %v2723 = vadd.f32 %v2694, %v2722
      %2724 = vmatmul.bf16.gmra.mxu0 %v2670
      %v2725 = vpop.f32.mrf.mxu0
      %v2726 = vadd.f32 %v2697, %v2725
      %v2727 = vpop.f32.mrf.mxu0
      %v2728 = vadd.f32 %v2699, %v2727
      %2729 = vdwg.mxu0
      %2730 = vmatpush.bf16.msra.mxu0 %v2627
      %2731 = vmatpush.bf16.msra.mxu0 %v2625
      %2732 = vmatpush.bf16.msra.mxu0 %v2623
      %2733 = vmatpush.bf16.msra.mxu0 %v2621
      %2734 = vmatpush.bf16.msra.mxu0 %v2619
      %2735 = vmatpush.bf16.msra.mxu0 %v2617
      %2736 = vmatpush.bf16.msra.mxu0 %v2615
      %2737 = vmatpush.bf16.msra.mxu0 %v2613
      %2738 = vmatmul.bf16.gmra.mxu0 %v2492
      %v2739 = vpop.f32.mrf.mxu0
      %v2740 = vadd.f32 %v2449, %v2739
      %v2741 = vpop.f32.mrf.mxu0
      %v2742 = vadd.f32 %v2451, %v2741
      %2743 = vmatmul.bf16.gmra.mxu0 %v2494
      %v2744 = vpop.f32.mrf.mxu0
      %v2745 = vadd.f32 %v2454, %v2744
      %v2746 = vpop.f32.mrf.mxu0
      %v2747 = vadd.f32 %v2456, %v2746
      %2748 = vmatmul.bf16.gmra.mxu0 %v2496
      %v2749 = vpop.f32.mrf.mxu0
      %v2750 = vadd.f32 %v2459, %v2749
      %v2751 = vpop.f32.mrf.mxu0
      %v2752 = vadd.f32 %v2461, %v2751
      %2753 = vmatmul.bf16.gmra.mxu0 %v2498
      %v2754 = vpop.f32.mrf.mxu0
      %v2755 = vadd.f32 %v2464, %v2754
      %v2756 = vpop.f32.mrf.mxu0
      %v2757 = vadd.f32 %v2466, %v2756
      %2758 = vdwg.mxu0
      %2759 = vmatpush.bf16.msra.mxu0 0
      %2760 = vmatpush.bf16.msra.mxu0 0
      %2761 = vmatpush.bf16.msra.mxu0 0
      %2762 = vmatpush.bf16.msra.mxu0 0
      %2763 = vmatpush.bf16.msra.mxu0 %v2635
      %2764 = vmatpush.bf16.msra.mxu0 %v2633
      %2765 = vmatpush.bf16.msra.mxu0 %v2631
      %2766 = vmatpush.bf16.msra.mxu0 %v2629
      %2767 = vmatmul.bf16.gmra.mxu0 %v2661
      %v2768 = vpop.f32.mrf.mxu0
      %v2769 = vadd.f32 %v2740, %v2768
      %v2770 = vpop.f32.mrf.mxu0
      %v2771 = vadd.f32 %v2742, %v2770
      %2772 = vmatmul.bf16.gmra.mxu0 %v2664
      %v2773 = vpop.f32.mrf.mxu0
      %v2774 = vadd.f32 %v2745, %v2773
      %v2775 = vpop.f32.mrf.mxu0
      %v2776 = vadd.f32 %v2747, %v2775
      %2777 = vmatmul.bf16.gmra.mxu0 %v2667
      %v2778 = vpop.f32.mrf.mxu0
      %v2779 = vadd.f32 %v2750, %v2778
      %v2780 = vpop.f32.mrf.mxu0
      %v2781 = vadd.f32 %v2752, %v2780
      %2782 = vmatmul.bf16.gmra.mxu0 %v2670
      %v2783 = vpop.f32.mrf.mxu0
      %v2784 = vadd.f32 %v2755, %v2783
      %v2785 = vpop.f32.mrf.mxu0
      %v2786 = vadd.f32 %v2757, %v2785
      %2787 = vdwg.mxu0
      %2788 = vrot.lane.b32.xlu0 %v2015, 112
      %v2789 = vpop.permute.xlu0 %2788
      %2790 = vrot.lane.b32.xlu0 %v2016, 112
      %v2791 = vpop.permute.xlu0 %2790
      %2792 = vrot.lane.b32.xlu0 %v2017, 112
      %v2793 = vpop.permute.xlu0 %2792
      %2794 = vrot.lane.b32.xlu0 %v2018, 112
      %v2795 = vpop.permute.xlu0 %2794
      %2796 = vrot.lane.b32.xlu0 %v2019, 112
      %v2797 = vpop.permute.xlu0 %2796
      %2798 = vrot.lane.b32.xlu0 %v2020, 112
      %v2799 = vpop.permute.xlu0 %2798
      %2800 = vrot.lane.b32.xlu0 %v2021, 112
      %v2801 = vpop.permute.xlu0 %2800
      %2802 = vrot.lane.b32.xlu0 %v2022, 112
      %v2803 = vpop.permute.xlu0 %2802
      %2804 = vrot.lane.b32.xlu0 %v2023, 112
      %v2805 = vpop.permute.xlu0 %2804
      %2806 = vrot.lane.b32.xlu0 %v2024, 112
      %v2807 = vpop.permute.xlu0 %2806
      %2808 = vrot.lane.b32.xlu0 %v2025, 112
      %v2809 = vpop.permute.xlu0 %2808
      %2810 = vrot.lane.b32.xlu0 %v2026, 112
      %v2811 = vpop.permute.xlu0 %2810
      %v2812 = vsel %vm405, %v2789, %v2791
      %v2813 = vsel %vm405, %v2791, %v2793
      %v2814 = vsel %vm405, %v2795, %v2797
      %v2815 = vsel %vm405, %v2797, %v2799
      %v2816 = vsel %vm405, %v2801, %v2803
      %v2817 = vsel %vm405, %v2803, %v2805
      %v2818 = vsel %vm405, %v2807, %v2809
      %v2819 = vsel %vm405, %v2809, %v2811
      %v2832 = vsel %vm1342, %v1907, 0
      %v2833 = vsel %vm1349, %v1908, 0
      %v2834 = vsel %vm1356, %v1909, 0
      %v2835 = vsel %vm1342, %v1910, 0
      %v2836 = vsel %vm1349, %v1911, 0
      %v2837 = vsel %vm1356, %v1912, 0
      %v2838 = vsel %vm1342, %v1913, 0
      %v2839 = vsel %vm1349, %v1914, 0
      %v2840 = vsel %vm1356, %v1915, 0
      %v2841 = vsel %vm1342, %v1916, 0
      %v2842 = vsel %vm1349, %v1917, 0
      %v2843 = vsel %vm1356, %v1918, 0
      %v2844 = vsel %vm1342, %v2789, 0
      %v2845 = vsel %vm1349, %v2812, 0
      %v2846 = vsel %vm1356, %v2813, 0
      %v2847 = vsel %vm1342, %v2795, 0
      %v2848 = vsel %vm1349, %v2814, 0
      %v2849 = vsel %vm1356, %v2815, 0
      %v2850 = vsel %vm1342, %v2801, 0
      %v2851 = vsel %vm1349, %v2816, 0
      %v2852 = vsel %vm1356, %v2817, 0
      %v2853 = vsel %vm1342, %v2807, 0
      %v2854 = vsel %vm1349, %v2818, 0
      %v2855 = vsel %vm1356, %v2819, 0
      %v2856 = vsel %vm1342, %v2028, 0
      %v2857 = vsel %vm1349, %v2051, 0
      %v2858 = vsel %vm1356, %v2052, 0
      %v2859 = vsel %vm1342, %v2034, 0
      %v2860 = vsel %vm1349, %v2053, 0
      %v2861 = vsel %vm1356, %v2054, 0
      %v2862 = vsel %vm1342, %v2040, 0
      %v2863 = vsel %vm1349, %v2055, 0
      %v2864 = vsel %vm1356, %v2056, 0
      %v2865 = vsel %vm1342, %v2046, 0
      %v2866 = vsel %vm1349, %v2057, 0
      %v2867 = vsel %vm1356, %v2058, 0
      %s2868 = scalar_lea.vmem %s3, 128
      %v2869 = vld [vmem:[%s2868] sm:$0xff]
      %v2870 = vld [vmem:[%s2868 + $0x8] sm:$0xff]
      %v2871 = vld [vmem:[%s2868 + $0x10] sm:$0xff]
      %v2872 = vld [vmem:[%s2868 + $0x18] sm:$0xff]
      %v2873 = vld [vmem:[%s2868 + $0x20] sm:$0xff]
      %v2874 = vld [vmem:[%s2868 + $0x28] sm:$0xff]
      %v2875 = vld [vmem:[%s2868 + $0x30] sm:$0xff]
      %v2876 = vld [vmem:[%s2868 + $0x38] sm:$0xff]
      %v2885 = vunpack.c.l.b16 %v2869
      %v2886 = vunpack.c.h.b16 %v2869
      %v2887 = vunpack.c.l.b16 %v2870
      %v2888 = vunpack.c.h.b16 %v2870
      %v2889 = vunpack.c.l.b16 %v2871
      %v2890 = vunpack.c.h.b16 %v2871
      %v2891 = vunpack.c.l.b16 %v2872
      %v2892 = vunpack.c.h.b16 %v2872
      %v2893 = vunpack.c.l.b16 %v2873
      %v2894 = vunpack.c.h.b16 %v2873
      %v2895 = vunpack.c.l.b16 %v2874
      %v2896 = vunpack.c.h.b16 %v2874
      %v2897 = vunpack.c.l.b16 %v2875
      %v2898 = vunpack.c.h.b16 %v2875
      %v2899 = vunpack.c.l.b16 %v2876
      %v2900 = vunpack.c.h.b16 %v2876
      %v2901 = vpack.c.b16 %v2887, %v2885
      %v2902 = vpack.c.b16 %v2888, %v2886
      %v2903 = vpack.c.b16 %v2891, %v2889
      %v2904 = vpack.c.b16 %v2892, %v2890
      %v2905 = vpack.c.b16 %v2895, %v2893
      %v2906 = vpack.c.b16 %v2896, %v2894
      %v2907 = vpack.c.b16 %v2899, %v2897
      %v2908 = vpack.c.b16 %v2900, %v2898
      %2949 = vrot.lane.b32.xlu0 %v2832, 15
      %v2950 = vpop.permute.xlu0 %2949
      %2951 = vrot.lane.b32.xlu0 %v2833, 15
      %v2952 = vpop.permute.xlu0 %2951
      %2953 = vrot.lane.b32.xlu0 %v2834, 15
      %v2954 = vpop.permute.xlu0 %2953
      %2955 = vrot.lane.b32.xlu0 %v2835, 15
      %v2956 = vpop.permute.xlu0 %2955
      %2957 = vrot.lane.b32.xlu0 %v2836, 15
      %v2958 = vpop.permute.xlu0 %2957
      %2959 = vrot.lane.b32.xlu0 %v2837, 15
      %v2960 = vpop.permute.xlu0 %2959
      %2961 = vrot.lane.b32.xlu0 %v2838, 15
      %v2962 = vpop.permute.xlu0 %2961
      %2963 = vrot.lane.b32.xlu0 %v2839, 15
      %v2964 = vpop.permute.xlu0 %2963
      %2965 = vrot.lane.b32.xlu0 %v2840, 15
      %v2966 = vpop.permute.xlu0 %2965
      %2967 = vrot.lane.b32.xlu0 %v2841, 15
      %v2968 = vpop.permute.xlu0 %2967
      %2969 = vrot.lane.b32.xlu0 %v2842, 15
      %v2970 = vpop.permute.xlu0 %2969
      %2971 = vrot.lane.b32.xlu0 %v2843, 15
      %v2972 = vpop.permute.xlu0 %2971
      %2973 = vrot.lane.b32.xlu0 %v2844, 15
      %v2974 = vpop.permute.xlu0 %2973
      %2975 = vrot.lane.b32.xlu0 %v2845, 15
      %v2976 = vpop.permute.xlu0 %2975
      %2977 = vrot.lane.b32.xlu0 %v2846, 15
      %v2978 = vpop.permute.xlu0 %2977
      %2979 = vrot.lane.b32.xlu0 %v2847, 15
      %v2980 = vpop.permute.xlu0 %2979
      %2981 = vrot.lane.b32.xlu0 %v2848, 15
      %v2982 = vpop.permute.xlu0 %2981
      %2983 = vrot.lane.b32.xlu0 %v2849, 15
      %v2984 = vpop.permute.xlu0 %2983
      %2985 = vrot.lane.b32.xlu0 %v2850, 15
      %v2986 = vpop.permute.xlu0 %2985
      %2987 = vrot.lane.b32.xlu0 %v2851, 15
      %v2988 = vpop.permute.xlu0 %2987
      %2989 = vrot.lane.b32.xlu0 %v2852, 15
      %v2990 = vpop.permute.xlu0 %2989
      %2991 = vrot.lane.b32.xlu0 %v2853, 15
      %v2992 = vpop.permute.xlu0 %2991
      %2993 = vrot.lane.b32.xlu0 %v2854, 15
      %v2994 = vpop.permute.xlu0 %2993
      %2995 = vrot.lane.b32.xlu0 %v2855, 15
      %v2996 = vpop.permute.xlu0 %2995
      %2997 = vrot.lane.b32.xlu0 %v2856, 15
      %v2998 = vpop.permute.xlu0 %2997
      %2999 = vrot.lane.b32.xlu0 %v2857, 15
      %v3000 = vpop.permute.xlu0 %2999
      %3001 = vrot.lane.b32.xlu0 %v2858, 15
      %v3002 = vpop.permute.xlu0 %3001
      %3003 = vrot.lane.b32.xlu0 %v2859, 15
      %v3004 = vpop.permute.xlu0 %3003
      %3005 = vrot.lane.b32.xlu0 %v2860, 15
      %v3006 = vpop.permute.xlu0 %3005
      %3007 = vrot.lane.b32.xlu0 %v2861, 15
      %v3008 = vpop.permute.xlu0 %3007
      %3009 = vrot.lane.b32.xlu0 %v2862, 15
      %v3010 = vpop.permute.xlu0 %3009
      %3011 = vrot.lane.b32.xlu0 %v2863, 15
      %v3012 = vpop.permute.xlu0 %3011
      %3013 = vrot.lane.b32.xlu0 %v2864, 15
      %v3014 = vpop.permute.xlu0 %3013
      %3015 = vrot.lane.b32.xlu0 %v2865, 15
      %v3016 = vpop.permute.xlu0 %3015
      %3017 = vrot.lane.b32.xlu0 %v2866, 15
      %v3018 = vpop.permute.xlu0 %3017
      %3019 = vrot.lane.b32.xlu0 %v2867, 15
      %v3020 = vpop.permute.xlu0 %3019
      %v3021 = vsel %vm1546, %v2950, %v2952
      %v3022 = vsel %vm1546, %v2952, %v2954
      %v3023 = vsel %vm1546, %v2956, %v2958
      %v3024 = vsel %vm1546, %v2958, %v2960
      %v3025 = vsel %vm1546, %v2962, %v2964
      %v3026 = vsel %vm1546, %v2964, %v2966
      %v3027 = vsel %vm1546, %v2968, %v2970
      %v3028 = vsel %vm1546, %v2970, %v2972
      %v3029 = vsel %vm1546, %v2974, %v2976
      %v3030 = vsel %vm1546, %v2976, %v2978
      %v3031 = vsel %vm1546, %v2980, %v2982
      %v3032 = vsel %vm1546, %v2982, %v2984
      %v3033 = vsel %vm1546, %v2986, %v2988
      %v3034 = vsel %vm1546, %v2988, %v2990
      %v3035 = vsel %vm1546, %v2992, %v2994
      %v3036 = vsel %vm1546, %v2994, %v2996
      %v3037 = vsel %vm1546, %v2998, %v3000
      %v3038 = vsel %vm1546, %v3000, %v3002
      %v3039 = vsel %vm1546, %v3004, %v3006
      %v3040 = vsel %vm1546, %v3006, %v3008
      %v3041 = vsel %vm1546, %v3010, %v3012
      %v3042 = vsel %vm1546, %v3012, %v3014
      %v3043 = vsel %vm1546, %v3016, %v3018
      %v3044 = vsel %vm1546, %v3018, %v3020
      %v3070 = vsel %vm828, %v2902, 0
      %v3073 = vsel %vm828, %v2904, 0
      %v3076 = vsel %vm828, %v2906, 0
      %v3079 = vsel %vm828, %v2908, 0
      %3081 = vmatpush.bf16.msra.mxu0 %v3035
      %3082 = vmatpush.bf16.msra.mxu0 %v3033
      %3083 = vmatpush.bf16.msra.mxu0 %v3031
      %3084 = vmatpush.bf16.msra.mxu0 %v3029
      %3085 = vmatpush.bf16.msra.mxu0 %v3027
      %3086 = vmatpush.bf16.msra.mxu0 %v3025
      %3087 = vmatpush.bf16.msra.mxu0 %v3023
      %3088 = vmatpush.bf16.msra.mxu0 %v3021
      %3089 = vmatmul.bf16.gmra.mxu0 %v2901
      %v3090 = vpop.f32.mrf.mxu0
      %v3091 = vadd.f32 0.0, %v3090
      %v3092 = vpop.f32.mrf.mxu0
      %v3093 = vadd.f32 0.0, %v3092
      %3094 = vmatmul.bf16.gmra.mxu0 %v2903
      %v3095 = vpop.f32.mrf.mxu0
      %v3096 = vadd.f32 0.0, %v3095
      %v3097 = vpop.f32.mrf.mxu0
      %v3098 = vadd.f32 0.0, %v3097
      %3099 = vmatmul.bf16.gmra.mxu0 %v2905
      %v3100 = vpop.f32.mrf.mxu0
      %v3101 = vadd.f32 0.0, %v3100
      %v3102 = vpop.f32.mrf.mxu0
      %v3103 = vadd.f32 0.0, %v3102
      %3104 = vmatmul.bf16.gmra.mxu0 %v2907
      %v3105 = vpop.f32.mrf.mxu0
      %v3106 = vadd.f32 0.0, %v3105
      %v3107 = vpop.f32.mrf.mxu0
      %v3108 = vadd.f32 0.0, %v3107
      %3109 = vdwg.mxu0
      %3110 = vmatpush.bf16.msra.mxu0 0
      %3111 = vmatpush.bf16.msra.mxu0 0
      %3112 = vmatpush.bf16.msra.mxu0 0
      %3113 = vmatpush.bf16.msra.mxu0 0
      %3114 = vmatpush.bf16.msra.mxu0 %v3043
      %3115 = vmatpush.bf16.msra.mxu0 %v3041
      %3116 = vmatpush.bf16.msra.mxu0 %v3039
      %3117 = vmatpush.bf16.msra.mxu0 %v3037
      %3118 = vmatmul.bf16.gmra.mxu0 %v3070
      %v3119 = vpop.f32.mrf.mxu0
      %v3120 = vadd.f32 %v3091, %v3119
      %v3121 = vpop.f32.mrf.mxu0
      %v3122 = vadd.f32 %v3093, %v3121
      %3123 = vmatmul.bf16.gmra.mxu0 %v3073
      %v3124 = vpop.f32.mrf.mxu0
      %v3125 = vadd.f32 %v3096, %v3124
      %v3126 = vpop.f32.mrf.mxu0
      %v3127 = vadd.f32 %v3098, %v3126
      %3128 = vmatmul.bf16.gmra.mxu0 %v3076
      %v3129 = vpop.f32.mrf.mxu0
      %v3130 = vadd.f32 %v3101, %v3129
      %v3131 = vpop.f32.mrf.mxu0
      %v3132 = vadd.f32 %v3103, %v3131
      %3133 = vmatmul.bf16.gmra.mxu0 %v3079
      %v3134 = vpop.f32.mrf.mxu0
      %v3135 = vadd.f32 %v3106, %v3134
      %v3136 = vpop.f32.mrf.mxu0
      %v3137 = vadd.f32 %v3108, %v3136
      %3138 = vdwg.mxu0
      %3139 = vmatpush.bf16.msra.mxu0 %v3036
      %3140 = vmatpush.bf16.msra.mxu0 %v3034
      %3141 = vmatpush.bf16.msra.mxu0 %v3032
      %3142 = vmatpush.bf16.msra.mxu0 %v3030
      %3143 = vmatpush.bf16.msra.mxu0 %v3028
      %3144 = vmatpush.bf16.msra.mxu0 %v3026
      %3145 = vmatpush.bf16.msra.mxu0 %v3024
      %3146 = vmatpush.bf16.msra.mxu0 %v3022
      %3147 = vmatmul.bf16.gmra.mxu0 %v2901
      %v3148 = vpop.f32.mrf.mxu0
      %v3149 = vadd.f32 0.0, %v3148
      %v3150 = vpop.f32.mrf.mxu0
      %v3151 = vadd.f32 0.0, %v3150
      %3152 = vmatmul.bf16.gmra.mxu0 %v2903
      %v3153 = vpop.f32.mrf.mxu0
      %v3154 = vadd.f32 0.0, %v3153
      %v3155 = vpop.f32.mrf.mxu0
      %v3156 = vadd.f32 0.0, %v3155
      %3157 = vmatmul.bf16.gmra.mxu0 %v2905
      %v3158 = vpop.f32.mrf.mxu0
      %v3159 = vadd.f32 0.0, %v3158
      %v3160 = vpop.f32.mrf.mxu0
      %v3161 = vadd.f32 0.0, %v3160
      %3162 = vmatmul.bf16.gmra.mxu0 %v2907
      %v3163 = vpop.f32.mrf.mxu0
      %v3164 = vadd.f32 0.0, %v3163
      %v3165 = vpop.f32.mrf.mxu0
      %v3166 = vadd.f32 0.0, %v3165
      %3167 = vdwg.mxu0
      %3168 = vmatpush.bf16.msra.mxu0 0
      %3169 = vmatpush.bf16.msra.mxu0 0
      %3170 = vmatpush.bf16.msra.mxu0 0
      %3171 = vmatpush.bf16.msra.mxu0 0
      %3172 = vmatpush.bf16.msra.mxu0 %v3044
      %3173 = vmatpush.bf16.msra.mxu0 %v3042
      %3174 = vmatpush.bf16.msra.mxu0 %v3040
      %3175 = vmatpush.bf16.msra.mxu0 %v3038
      %3176 = vmatmul.bf16.gmra.mxu0 %v3070
      %v3177 = vpop.f32.mrf.mxu0
      %v3178 = vadd.f32 %v3149, %v3177
      %v3179 = vpop.f32.mrf.mxu0
      %v3180 = vadd.f32 %v3151, %v3179
      %3181 = vmatmul.bf16.gmra.mxu0 %v3073
      %v3182 = vpop.f32.mrf.mxu0
      %v3183 = vadd.f32 %v3154, %v3182
      %v3184 = vpop.f32.mrf.mxu0
      %v3185 = vadd.f32 %v3156, %v3184
      %3186 = vmatmul.bf16.gmra.mxu0 %v3076
      %v3187 = vpop.f32.mrf.mxu0
      %v3188 = vadd.f32 %v3159, %v3187
      %v3189 = vpop.f32.mrf.mxu0
      %v3190 = vadd.f32 %v3161, %v3189
      %3191 = vmatmul.bf16.gmra.mxu0 %v3079
      %v3192 = vpop.f32.mrf.mxu0
      %v3193 = vadd.f32 %v3164, %v3192
      %v3194 = vpop.f32.mrf.mxu0
      %v3195 = vadd.f32 %v3166, %v3194
      %3196 = vdwg.mxu0
      %v3197 = vadd.f32 %v2711, %v3120
      %v3198 = vadd.f32 %v2769, %v3178
      %v3199 = vadd.f32 %v2713, %v3122
      %v3200 = vadd.f32 %v2771, %v3180
      %v3201 = vadd.f32 %v2716, %v3125
      %v3202 = vadd.f32 %v2774, %v3183
      %v3203 = vadd.f32 %v2718, %v3127
      %v3204 = vadd.f32 %v2776, %v3185
      %v3205 = vadd.f32 %v2721, %v3130
      %v3206 = vadd.f32 %v2779, %v3188
      %v3207 = vadd.f32 %v2723, %v3132
      %v3208 = vadd.f32 %v2781, %v3190
      %v3209 = vadd.f32 %v2726, %v3135
      %v3210 = vadd.f32 %v2784, %v3193
      %v3211 = vadd.f32 %v2728, %v3137
      %v3212 = vadd.f32 %v2786, %v3195
      %v3213 = vld [vmem:[%s4] sm:$0xff]
      %v3214 = vld [vmem:[%s4 + $0x8] sm:$0xff]
      %v3215 = vld [vmem:[%s4 + $0x10] sm:$0xff]
      %v3216 = vld [vmem:[%s4 + $0x18] sm:$0xff]
      %v3217 = vld [vmem:[%s4 + $0x20] sm:$0xff]
      %v3218 = vld [vmem:[%s4 + $0x28] sm:$0xff]
      %v3219 = vld [vmem:[%s4 + $0x30] sm:$0xff]
      %v3220 = vld [vmem:[%s4 + $0x38] sm:$0xff]
      %3222 = vset.pattern.permute.xlu0 0
      %3223 = vperm.xlu0 %3222, %v3213
      %v3224 = vpop.permute.xlu0 %3223
      %3227 = vset.pattern.permute.xlu0 0
      %3228 = vperm.xlu0 %3227, %v3214
      %v3229 = vpop.permute.xlu0 %3228
      %3232 = vset.pattern.permute.xlu0 0
      %3233 = vperm.xlu0 %3232, %v3215
      %v3234 = vpop.permute.xlu0 %3233
      %3237 = vset.pattern.permute.xlu0 0
      %3238 = vperm.xlu0 %3237, %v3216
      %v3239 = vpop.permute.xlu0 %3238
      %3242 = vset.pattern.permute.xlu0 0
      %3243 = vperm.xlu0 %3242, %v3217
      %v3244 = vpop.permute.xlu0 %3243
      %3247 = vset.pattern.permute.xlu0 0
      %3248 = vperm.xlu0 %3247, %v3218
      %v3249 = vpop.permute.xlu0 %3248
      %3252 = vset.pattern.permute.xlu0 0
      %3253 = vperm.xlu0 %3252, %v3219
      %v3254 = vpop.permute.xlu0 %3253
      %3257 = vset.pattern.permute.xlu0 0
      %3258 = vperm.xlu0 %3257, %v3220
      %v3259 = vpop.permute.xlu0 %3258
      %v3261 = vadd.f32 %v3197, %v3224
      %v3262 = vadd.f32 %v3198, %v3224
      %v3263 = vadd.f32 %v3199, %v3229
      %v3264 = vadd.f32 %v3200, %v3229
      %v3265 = vadd.f32 %v3201, %v3234
      %v3266 = vadd.f32 %v3202, %v3234
      %v3267 = vadd.f32 %v3203, %v3239
      %v3268 = vadd.f32 %v3204, %v3239
      %v3269 = vadd.f32 %v3205, %v3244
      %v3270 = vadd.f32 %v3206, %v3244
      %v3271 = vadd.f32 %v3207, %v3249
      %v3272 = vadd.f32 %v3208, %v3249
      %v3273 = vadd.f32 %v3209, %v3254
      %v3274 = vadd.f32 %v3210, %v3254
      %v3275 = vadd.f32 %v3211, %v3259
      %v3276 = vadd.f32 %v3212, %v3259
      %v3277 = vadd.f32 %v253, %v3261
      %v3278 = vadd.f32 %v254, %v3262
      %v3279 = vadd.f32 %v255, %v3263
      %v3280 = vadd.f32 %v256, %v3264
      %v3281 = vadd.f32 %v257, %v3265
      %v3282 = vadd.f32 %v258, %v3266
      %v3283 = vadd.f32 %v259, %v3267
      %v3284 = vadd.f32 %v260, %v3268
      %v3285 = vadd.f32 %v261, %v3269
      %v3286 = vadd.f32 %v262, %v3270
      %v3287 = vadd.f32 %v263, %v3271
      %v3288 = vadd.f32 %v264, %v3272
      %v3289 = vadd.f32 %v265, %v3273
      %v3290 = vadd.f32 %v266, %v3274
      %v3291 = vadd.f32 %v267, %v3275
      %v3292 = vadd.f32 %v268, %v3276
      %3293 = vst [vmem:[%s224] sm:$0xff] %v3277
      %3294 = vst [vmem:[%s224 + $0x8] sm:$0xff] %v3278
      %3295 = vst [vmem:[%s224 + $0x10] sm:$0xff] %v3279
      %3296 = vst [vmem:[%s224 + $0x18] sm:$0xff] %v3280
      %3297 = vst [vmem:[%s224 + $0x20] sm:$0xff] %v3281
      %3298 = vst [vmem:[%s224 + $0x28] sm:$0xff] %v3282
      %3299 = vst [vmem:[%s224 + $0x30] sm:$0xff] %v3283
      %3300 = vst [vmem:[%s224 + $0x38] sm:$0xff] %v3284
      %3301 = vst [vmem:[%s224 + $0x40] sm:$0xff] %v3285
      %3302 = vst [vmem:[%s224 + $0x48] sm:$0xff] %v3286
      %3303 = vst [vmem:[%s224 + $0x50] sm:$0xff] %v3287
      %3304 = vst [vmem:[%s224 + $0x58] sm:$0xff] %v3288
      %3305 = vst [vmem:[%s224 + $0x60] sm:$0xff] %v3289
      %3306 = vst [vmem:[%s224 + $0x68] sm:$0xff] %v3290
      %3307 = vst [vmem:[%s224 + $0x70] sm:$0xff] %v3291
      %3308 = vst [vmem:[%s224 + $0x78] sm:$0xff] %v3292
      %p3309 = scmp.lt.s32.totalorder %s16, 1
      %s3310 = scalar_select %p3309, %s16, 1
      %s3311 = smul.addr %s3310, 16
      %s3312 = smul.addr %s3311, 8
      %s3313 = scalar_lea.vmem %s5, %s3312
      // Predicated region
      $region41: #{residual_block_nobn.1} parent=39 // pred_check
        %p3314 = pneg %p144
      $region42: #{residual_block_nobn.1} parent=39 // pred_check_branch
        %3316 = sbr.rel (%p3314) target = $region44
      $region43: #{residual_block_nobn.1} parent=39 // pred_region
        _
      $region44: #{residual_block_nobn.1} parent=39 // pred_fallthru
        _
    $region40: #{residual_block_nobn.1} parent=5 // pred_fallthru
      _
    %p3317 = scmp.le.s32.totalorder 2, %s11
    // Predicated region
    $region45: #{residual_block_nobn.1} parent=5 // pred_check
      %p3318 = pneg %p3317
    $region46: #{residual_block_nobn.1} parent=5 // pred_check_branch
      %3320 = sbr.rel (%p3318) target = $region48
    $region47: #{residual_block_nobn.1} parent=5 // pred_region
      %s3321 = ssub.s32 %s11, 2
      // Predicated region
      $region49: #{residual_block_nobn.1} parent=47 // pred_check
        %p3322 = pneg %p150
      $region50: #{residual_block_nobn.1} parent=47 // pred_check_branch
        %3324 = sbr.rel (%p3322) target = $region52
      $region51: #{residual_block_nobn.1} parent=47 // pred_region
        %p3325 = scmp.lt.s32.totalorder %s17, 1
        %s3326 = scalar_select %p3325, %s17, 1
        %s3327 = smul.addr %s3326, 16
        %s3328 = smul.addr %s3327, 8
        %s3329 = scalar_lea.vmem %s5, %s3328
      $region52: #{residual_block_nobn.1} parent=47 // pred_fallthru
        _
    $region48: #{residual_block_nobn.1} parent=5 // pred_fallthru
      _
  $region6: #{residual_block_nobn.1} parent=0 // loop_footer
    %s15 = sadd.s32 1, %s11
  $region7: #{residual_block_nobn.1} parent=0 // loop_footer_branch
    %10 = sbr.rel target = $region3
  $region8: #{residual_block_nobn.1} parent=0 // loop_exit
    _

</llo_original>
